<compile_context>
chip_gen: v7x
topology: tpu7x:2x2x1
jax: 0.10.0
libtpu: 0.0.40
codegen_flags: <defaults>
</compile_context>

<pallas_src>
import math
import functools

import jax
import jax.numpy as jnp
from jax import lax
from jax.experimental import pallas as pl
from jax.experimental.pallas import tpu as pltpu


# ----------------------------------------------------------------------------
# Tiling helper
# ----------------------------------------------------------------------------
def _pick_tile(dim, desired, align):
    """Largest tile <= desired that is a multiple of `align` and divides `dim`.
    Falls back to the full dim (always a legal block)."""
    if dim <= desired:
        return dim
    t = (desired // align) * align
    while t >= align:
        if dim % t == 0:
            return t
        t -= align
    return dim


# ----------------------------------------------------------------------------
# Linear projection kernel (tiled matmul + bias)
# ----------------------------------------------------------------------------
def _linear_kernel(x_ref, wt_ref, b_ref, o_ref, acc_ref):
    # x_ref: (tm, tk), wt_ref: (tk, tn), b_ref: (1, tn), o_ref: (tm, tn)
    # acc_ref: (tm, tn) f32 scratch, resident across the K (reduction) axis.
    @pl.when(pl.program_id(2) == 0)
    def _():
        acc_ref[...] = jnp.zeros_like(acc_ref)

    acc_ref[...] += jnp.dot(x_ref[...], wt_ref[...],
                            preferred_element_type=jnp.float32)

    @pl.when(pl.program_id(2) == pl.num_programs(2) - 1)
    def _():
        o_ref[...] = (acc_ref[...] + b_ref[...].astype(jnp.float32)
                      ).astype(o_ref.dtype)


def pallas_linear(x2d, wt, b2d, *, tm_desired=256, tn_desired=256, tk_desired=512):
    """x2d: (M, K), wt: (K, N) pre-transposed weight, b2d: (1, N) -> (M, N)."""
    M, K = x2d.shape
    K2, N = wt.shape
    assert K == K2 and b2d.shape == (1, N)

    tm = _pick_tile(M, tm_desired, 8)
    tn = _pick_tile(N, tn_desired, 128)
    tk = _pick_tile(K, tk_desired, 128)
    grid = (M // tm, N // tn, K // tk)

    return pl.pallas_call(
        _linear_kernel,
        out_shape=jax.ShapeDtypeStruct((M, N), x2d.dtype),
        grid_spec=pltpu.PrefetchScalarGridSpec(
            num_scalar_prefetch=0,
            grid=grid,
            in_specs=[
                pl.BlockSpec((tm, tk), lambda i, j, k: (i, k)),
                pl.BlockSpec((tk, tn), lambda i, j, k: (k, j)),
                pl.BlockSpec((1, tn), lambda i, j, k: (0, j)),
            ],
            out_specs=pl.BlockSpec((tm, tn), lambda i, j, k: (i, j)),
            scratch_shapes=[pltpu.VMEM((tm, tn), jnp.float32)],
        ),
        compiler_params=pltpu.CompilerParams(
            dimension_semantics=("parallel", "parallel", "arbitrary"),
            vmem_limit_bytes=32 * 1024 * 1024,   # safe on v5e/v6e/v7x
        ),
    )(x2d, wt, b2d)


# ----------------------------------------------------------------------------
# Attention kernels
# ----------------------------------------------------------------------------
def _mha_core(q, kv, n_heads, d_head):
    """q: (tq, E) (scale already folded in), kv: (Lkv, 2E) = [K cols | V cols].
    Returns the merged multi-head attention output, (tq, E) in f32."""
    e = n_heads * d_head
    outs = []
    for h in range(n_heads):                       # static, unrolled head loop
        lo = h * d_head
        q_h = q[:, lo:lo + d_head]                 # (tq, Dh)
        k_h = kv[:, lo:lo + d_head]                # (Lkv, Dh)
        v_h = kv[:, e + lo:e + lo + d_head]        # (Lkv, Dh)

        # Scores: contract the last dim of both (no explicit k.T transpose).
        s = lax.dot_general(q_h, k_h, (((1,), (1,)), ((), ())),
                            preferred_element_type=jnp.float32)   # (tq, Lkv)

        # Softmax in f32 (v5e has no bf16 VPU/EUP path).
        m = jnp.max(s, axis=-1, keepdims=True)
        p = jnp.exp(s - m)
        denom = jnp.sum(p, axis=-1, keepdims=True)
        r = pl.reciprocal(denom, approx=True)      # EUP slot
        r = r * (2.0 - denom * r)                  # one Newton refinement
        p = p * r

        # Cast probabilities to V dtype (bf16 MXU path when inputs are bf16).
        out_h = jnp.dot(p.astype(v_h.dtype), v_h,
                        preferred_element_type=jnp.float32)        # (tq, Dh)
        outs.append(out_h)

    return jnp.concatenate(outs, axis=-1)          # (tq, E) f32, lane-dense


def _attn_kernel(q_ref, kv_ref, o_ref, *, n_heads, d_head):
    # q_ref: (1, tq, E), kv_ref: (1, Lkv, 2E), o_ref: (1, tq, E)
    attn = _mha_core(q_ref[0], kv_ref[0], n_heads, d_head)
    o_ref[0] = attn.astype(o_ref.dtype)


def _attn_out_kernel(q_ref, kv_ref, wo_ref, bo_ref, o_ref, *, n_heads, d_head):
    # Same as _attn_kernel but with the final out_proj fused in:
    # wo_ref: (E, E) pre-transposed weight, bo_ref: (1, E).
    attn = _mha_core(q_ref[0], kv_ref[0], n_heads, d_head)        # (tq, E) f32
    out = jnp.dot(attn.astype(wo_ref.dtype), wo_ref[...],
                  preferred_element_type=jnp.float32)
    out = out + bo_ref[...].astype(jnp.float32)
    o_ref[0] = out.astype(o_ref.dtype)


def pallas_attention(q, kv, n_heads, d_head, *, tq_desired=256):
    """q: (B, Lq, E), kv: (B, Lkv, 2E) -> (B, Lq, E). Scale folded into q."""
    B, Lq, E = q.shape
    _, Lkv, E2 = kv.shape
    assert E2 == 2 * E and E == n_heads * d_head

    tq = _pick_tile(Lq, tq_desired, 8)
    kernel = functools.partial(_attn_kernel, n_heads=n_heads, d_head=d_head)

    return pl.pallas_call(
        kernel,
        out_shape=jax.ShapeDtypeStruct((B, Lq, E), q.dtype),
        grid_spec=pltpu.PrefetchScalarGridSpec(
            num_scalar_prefetch=0,
            grid=(B, Lq // tq),
            in_specs=[
                pl.BlockSpec((1, tq, E), lambda b, qi: (b, qi, 0)),
                pl.BlockSpec((1, Lkv, 2 * E), lambda b, qi: (b, 0, 0)),
            ],
            out_specs=pl.BlockSpec((1, tq, E), lambda b, qi: (b, qi, 0)),
        ),
        compiler_params=pltpu.CompilerParams(
            dimension_semantics=("parallel", "parallel"),
            vmem_limit_bytes=32 * 1024 * 1024,
        ),
    )(q, kv)


def pallas_attention_outproj(q, kv, wo_t, bo, n_heads, d_head, *, tq_desired=256):
    """Fused attention + out_proj: q (B,Lq,E), kv (B,Lkv,2E), wo_t (E,E), bo (1,E)."""
    B, Lq, E = q.shape
    _, Lkv, E2 = kv.shape
    assert E2 == 2 * E and E == n_heads * d_head
    assert wo_t.shape == (E, E) and bo.shape == (1, E)

    tq = _pick_tile(Lq, tq_desired, 8)
    kernel = functools.partial(_attn_out_kernel, n_heads=n_heads, d_head=d_head)

    return pl.pallas_call(
        kernel,
        out_shape=jax.ShapeDtypeStruct((B, Lq, E), q.dtype),
        grid_spec=pltpu.PrefetchScalarGridSpec(
            num_scalar_prefetch=0,
            grid=(B, Lq // tq),
            in_specs=[
                pl.BlockSpec((1, tq, E), lambda b, qi: (b, qi, 0)),
                pl.BlockSpec((1, Lkv, 2 * E), lambda b, qi: (b, 0, 0)),
                pl.BlockSpec((E, E), lambda b, qi: (0, 0)),   # resident weight
                pl.BlockSpec((1, E), lambda b, qi: (0, 0)),
            ],
            out_specs=pl.BlockSpec((1, tq, E), lambda b, qi: (b, qi, 0)),
        ),
        compiler_params=pltpu.CompilerParams(
            dimension_semantics=("parallel", "parallel"),
            vmem_limit_bytes=32 * 1024 * 1024,
        ),
    )(q, kv, wo_t, bo)


# ----------------------------------------------------------------------------
# Parameter prep + forward
# ----------------------------------------------------------------------------
def prepare_params(params, n_heads):
    """One-time parameter prep:
       - pre-transpose all weights to (K, N),
       - fuse the K and V projections into one (d_cross, 2E) weight,
       - fold the 1/sqrt(d_head) softmax scale into the Q projection."""
    d_embed = params["wq"].shape[0]
    d_head = d_embed // n_heads
    scale = 1.0 / math.sqrt(d_head)
    wq_dtype = params["wq"].dtype
    return {
        "wq_t": (params["wq"].T * scale).astype(wq_dtype),              # (E, E)
        "bq": (params["bq"] * scale).reshape(1, -1).astype(wq_dtype),
        "wkv_t": jnp.concatenate([params["wk"].T, params["wv"].T], axis=1),  # (d_cross, 2E)
        "bkv": jnp.concatenate([params["bk"], params["bv"]]).reshape(1, -1),
        "wo_t": params["wo"].T,                                         # (E, E)
        "bo": params["bo"].reshape(1, -1),
    }


def cross_attention_forward(kparams, x, y, n_heads):
    """Pallas-backed equivalent of CrossAttention.forward (kparams from prepare_params)."""
    B, Lq, E = x.shape
    _, Lkv, d_cross = y.shape
    d_head = E // n_heads

    # Projections: Q from x (scale pre-folded), fused K|V from y.
    q = pallas_linear(x.reshape(B * Lq, E), kparams["wq_t"], kparams["bq"])            # (B*Lq, E)
    kv = pallas_linear(y.reshape(B * Lkv, d_cross), kparams["wkv_t"], kparams["bkv"])  # (B*Lkv, 2E)

    # Free reshapes only — no (B,H,L,Dh) transpose passes through HBM.
    q = q.reshape(B, Lq, E)
    kv = kv.reshape(B, Lkv, 2 * E)

    # Fuse the final out_proj into the attention kernel when its (E,E) weight
    # comfortably fits VMEM next to the q/kv/out blocks (true for all SD sizes);
    # this saves a full HBM write+read of the (B, Lq, E) attention output.
    fuse_out_proj = (E * E * x.dtype.itemsize) <= 8 * 1024 * 1024
    if fuse_out_proj:
        out = pallas_attention_outproj(q, kv, kparams["wo_t"], kparams["bo"],
                                       n_heads, d_head)                        # (B, Lq, E)
    else:
        o = pallas_attention(q, kv, n_heads, d_head)                           # (B, Lq, E)
        out = pallas_linear(o.reshape(B * Lq, E), kparams["wo_t"], kparams["bo"]
                            ).reshape(B, Lq, E)
    return out


# ----------------------------------------------------------------------------
# Pure-JAX reference (for correctness check)
# ----------------------------------------------------------------------------
def cross_attention_reference(params, x, y, n_heads):
    B, Lq, d_embed = x.shape
    _, Lkv, _ = y.shape
    d_head = d_embed // n_heads
    q = x @ params["wq"].T + params["bq"]
    k = y @ params["wk"].T + params["bk"]
    v = y @ params["wv"].T + params["bv"]
    q = q.reshape(B, Lq, n_heads, d_head).transpose(0, 2, 1, 3)
    k = k.reshape(B, Lkv, n_heads, d_head).transpose(0, 2, 1, 3)
    v = v.reshape(B, Lkv, n_heads, d_head).transpose(0, 2, 1, 3)
    w = jnp.einsum("bhqd,bhkd->bhqk", q, k) / math.sqrt(d_head)
    w = jax.nn.softmax(w, axis=-1)
    o = jnp.einsum("bhqk,bhkd->bhqd", w, v)
    o = o.transpose(0, 2, 1, 3).reshape(B, Lq, d_embed)
    return o @ params["wo"].T + params["bo"]


# ----------------------------------------------------------------------------
# Main
# ----------------------------------------------------------------------------
if __name__ == "__main__":
    # Small shapes consistent with the module.
    B, Lq, Lkv = 2, 8, 16
    n_heads, d_embed, d_cross = 4, 32, 24
    dtype = jnp.float32

    key = jax.random.PRNGKey(0)
    ks = jax.random.split(key, 10)

    # Deterministic parameter init (PyTorch Linear weight layout: (out, in)).
    def init_w(k, out_f, in_f):
        bound = 1.0 / math.sqrt(in_f)
        return jax.random.uniform(k, (out_f, in_f), dtype, -bound, bound)

    def init_b(k, out_f, in_f):
        bound = 1.0 / math.sqrt(in_f)
        return jax.random.uniform(k, (out_f,), dtype, -bound, bound)

    params = {
        "wq": init_w(ks[0], d_embed, d_embed), "bq": init_b(ks[1], d_embed, d_embed),
        "wk": init_w(ks[2], d_embed, d_cross), "bk": init_b(ks[3], d_embed, d_cross),
        "wv": init_w(ks[4], d_embed, d_cross), "bv": init_b(ks[5], d_embed, d_cross),
        "wo": init_w(ks[6], d_embed, d_embed), "bo": init_b(ks[7], d_embed, d_embed),
    }

    x = jax.random.normal(ks[8], (B, Lq, d_embed), dtype)
    y = jax.random.normal(ks[9], (B, Lkv, d_cross), dtype)

    # One-time parameter preparation (pre-transposed, fused, scale-folded).
    kparams = prepare_params(params, n_heads)

    fwd = jax.jit(functools.partial(cross_attention_forward, n_heads=n_heads))
    out = fwd(kparams, x, y)
    out = jax.block_until_ready(out)

    ref = cross_attention_reference(params, x, y, n_heads)
    assert out.shape == (B, Lq, d_embed)
    assert jnp.allclose(out, ref, atol=1e-4, rtol=1e-4), "mismatch vs reference"

    print("KERNEL_OK")
</pallas_src>

<mosaic_0001>
module attributes {stable_mosaic.version = 11 : i64} {
  func.func @_linear_kernel(%arg0: i32, %arg1: i32, %arg2: i32, %arg3: memref<16x32xf32, #tpu.memory_space<vmem>>, %arg4: memref<32x32xf32, #tpu.memory_space<vmem>>, %arg5: memref<1x32xf32, #tpu.memory_space<vmem>>, %arg6: memref<16x32xf32, #tpu.memory_space<vmem>>, %arg7: memref<16x32xf32, #tpu.memory_space<vmem>>) attributes {dimension_semantics = [#tpu.dimension_semantics<parallel>, #tpu.dimension_semantics<parallel>, #tpu.dimension_semantics<arbitrary>], iteration_bounds = array<i64: 1, 1, 1>, scalar_prefetch = 0 : i64, scratch_operands = 1 : i64, tpu.core_type = #tpu.core_type<tc>, window_params = [{transform_indices = @transform_0, window_bounds = array<i64: 16, 32>}, {transform_indices = @transform_1, window_bounds = array<i64: 32, 32>}, {transform_indices = @transform_2, window_bounds = array<i64: 1, 32>}, {transform_indices = @transform_3, window_bounds = array<i64: 16, 32>}]} {
    %c0_i32 = arith.constant 0 : i32
    %0 = arith.cmpi eq, %arg2, %c0_i32 : i32
    %1 = arith.extui %0 : i1 to i32
    %c0_i32_0 = arith.constant 0 : i32
    %2 = arith.cmpi ne, %1, %c0_i32_0 : i32
    scf.if %2 {
      %cst_10 = arith.constant 0.000000e+00 : f32
      %12 = vector.broadcast %cst_10 : f32 to vector<16x32xf32>
      %c0_11 = arith.constant 0 : index
      %c0_12 = arith.constant 0 : index
      %13 = vector.load %arg7[%c0_11, %c0_12] : memref<16x32xf32, #tpu.memory_space<vmem>>, vector<16x32xf32>
      tpu.vector_store %arg7[%c0_11, %c0_12], %12 {strides = array<i32>} : memref<16x32xf32, #tpu.memory_space<vmem>>, vector<16x32xf32>,
    } else {
    }
    %c0 = arith.constant 0 : index
    %c0_1 = arith.constant 0 : index
    %3 = vector.load %arg7[%c0, %c0_1] : memref<16x32xf32, #tpu.memory_space<vmem>>, vector<16x32xf32>
    %c0_2 = arith.constant 0 : index
    %c0_3 = arith.constant 0 : index
    %4 = vector.load %arg3[%c0_2, %c0_3] : memref<16x32xf32, #tpu.memory_space<vmem>>, vector<16x32xf32>
    %c0_4 = arith.constant 0 : index
    %c0_5 = arith.constant 0 : index
    %5 = vector.load %arg4[%c0_4, %c0_5] : memref<32x32xf32, #tpu.memory_space<vmem>>, vector<32x32xf32>
    %cst = arith.constant dense<0.000000e+00> : vector<16x32xf32>
    %6 = tpu.matmul %4, %5, %cst {dimension_numbers = #tpu.dot_dimension_numbers<[1], [0], [0], [1], [0, 0, 1, 1], [], []>} : vector<16x32xf32>, vector<32x32xf32>, vector<16x32xf32> -> vector<16x32xf32>
    %7 = arith.addf %3, %6 : vector<16x32xf32>
    %c0_6 = arith.constant 0 : index
    %c0_7 = arith.constant 0 : index
    %8 = vector.load %arg7[%c0_6, %c0_7] : memref<16x32xf32, #tpu.memory_space<vmem>>, vector<16x32xf32>
    tpu.vector_store %arg7[%c0_6, %c0_7], %7 {strides = array<i32>} : memref<16x32xf32, #tpu.memory_space<vmem>>, vector<16x32xf32>,
    %c0_i32_8 = arith.constant 0 : i32
    %9 = arith.cmpi eq, %arg2, %c0_i32_8 : i32
    %10 = arith.extui %9 : i1 to i32
    %c0_i32_9 = arith.constant 0 : i32
    %11 = arith.cmpi ne, %10, %c0_i32_9 : i32
    scf.if %11 {
      %c0_10 = arith.constant 0 : index
      %c0_11 = arith.constant 0 : index
      %12 = vector.load %arg7[%c0_10, %c0_11] : memref<16x32xf32, #tpu.memory_space<vmem>>, vector<16x32xf32>
      %c0_12 = arith.constant 0 : index
      %c0_13 = arith.constant 0 : index
      %13 = vector.load %arg5[%c0_12, %c0_13] : memref<1x32xf32, #tpu.memory_space<vmem>>, vector<1x32xf32>
      %14 = vector.broadcast %13 : vector<1x32xf32> to vector<16x32xf32>
      %15 = arith.addf %12, %14 : vector<16x32xf32>
      %c0_14 = arith.constant 0 : index
      %c0_15 = arith.constant 0 : index
      %16 = vector.load %arg6[%c0_14, %c0_15] : memref<16x32xf32, #tpu.memory_space<vmem>>, vector<16x32xf32>
      tpu.vector_store %arg6[%c0_14, %c0_15], %15 {strides = array<i32>} : memref<16x32xf32, #tpu.memory_space<vmem>>, vector<16x32xf32>,
    } else {
    }
    return
  }
  func.func @transform_0(%arg0: i32, %arg1: i32, %arg2: i32) -> (i32, i32) {
    %c0_i32 = arith.constant 0 : i32
    return %arg0, %arg2 : i32, i32
  }
  func.func @transform_1(%arg0: i32, %arg1: i32, %arg2: i32) -> (i32, i32) {
    %c0_i32 = arith.constant 0 : i32
    return %arg2, %arg1 : i32, i32
  }
  func.func @transform_2(%arg0: i32, %arg1: i32, %arg2: i32) -> (i32, i32) {
    %c0_i32 = arith.constant 0 : i32
    %c0_i32_0 = arith.constant 0 : i32
    return %c0_i32, %arg1 : i32, i32
  }
  func.func @transform_3(%arg0: i32, %arg1: i32, %arg2: i32) -> (i32, i32) {
    %c0_i32 = arith.constant 0 : i32
    return %arg0, %arg1 : i32, i32
  }
}

module attributes {stable_mosaic.version = 11 : i64} {
  func.func @_linear_kernel(%arg0: i32, %arg1: i32, %arg2: i32, %arg3: memref<32x24xf32, #tpu.memory_space<vmem>>, %arg4: memref<24x64xf32, #tpu.memory_space<vmem>>, %arg5: memref<1x64xf32, #tpu.memory_space<vmem>>, %arg6: memref<32x64xf32, #tpu.memory_space<vmem>>, %arg7: memref<32x64xf32, #tpu.memory_space<vmem>>) attributes {dimension_semantics = [#tpu.dimension_semantics<parallel>, #tpu.dimension_semantics<parallel>, #tpu.dimension_semantics<arbitrary>], iteration_bounds = array<i64: 1, 1, 1>, scalar_prefetch = 0 : i64, scratch_operands = 1 : i64, tpu.core_type = #tpu.core_type<tc>, window_params = [{transform_indices = @transform_0, window_bounds = array<i64: 32, 24>}, {transform_indices = @transform_1, window_bounds = array<i64: 24, 64>}, {transform_indices = @transform_2, window_bounds = array<i64: 1, 64>}, {transform_indices = @transform_3, window_bounds = array<i64: 32, 64>}]} {
    %c0_i32 = arith.constant 0 : i32
    %0 = arith.cmpi eq, %arg2, %c0_i32 : i32
    %1 = arith.extui %0 : i1 to i32
    %c0_i32_0 = arith.constant 0 : i32
    %2 = arith.cmpi ne, %1, %c0_i32_0 : i32
    scf.if %2 {
      %cst_10 = arith.constant 0.000000e+00 : f32
      %12 = vector.broadcast %cst_10 : f32 to vector<32x64xf32>
      %c0_11 = arith.constant 0 : index
      %c0_12 = arith.constant 0 : index
      %13 = vector.load %arg7[%c0_11, %c0_12] : memref<32x64xf32, #tpu.memory_space<vmem>>, vector<32x64xf32>
      tpu.vector_store %arg7[%c0_11, %c0_12], %12 {strides = array<i32>} : memref<32x64xf32, #tpu.memory_space<vmem>>, vector<32x64xf32>,
    } else {
    }
    %c0 = arith.constant 0 : index
    %c0_1 = arith.constant 0 : index
    %3 = vector.load %arg7[%c0, %c0_1] : memref<32x64xf32, #tpu.memory_space<vmem>>, vector<32x64xf32>
    %c0_2 = arith.constant 0 : index
    %c0_3 = arith.constant 0 : index
    %4 = vector.load %arg3[%c0_2, %c0_3] : memref<32x24xf32, #tpu.memory_space<vmem>>, vector<32x24xf32>
    %c0_4 = arith.constant 0 : index
    %c0_5 = arith.constant 0 : index
    %5 = vector.load %arg4[%c0_4, %c0_5] : memref<24x64xf32, #tpu.memory_space<vmem>>, vector<24x64xf32>
    %cst = arith.constant dense<0.000000e+00> : vector<32x64xf32>
    %6 = tpu.matmul %4, %5, %cst {dimension_numbers = #tpu.dot_dimension_numbers<[1], [0], [0], [1], [0, 0, 1, 1], [], []>} : vector<32x24xf32>, vector<24x64xf32>, vector<32x64xf32> -> vector<32x64xf32>
    %7 = arith.addf %3, %6 : vector<32x64xf32>
    %c0_6 = arith.constant 0 : index
    %c0_7 = arith.constant 0 : index
    %8 = vector.load %arg7[%c0_6, %c0_7] : memref<32x64xf32, #tpu.memory_space<vmem>>, vector<32x64xf32>
    tpu.vector_store %arg7[%c0_6, %c0_7], %7 {strides = array<i32>} : memref<32x64xf32, #tpu.memory_space<vmem>>, vector<32x64xf32>,
    %c0_i32_8 = arith.constant 0 : i32
    %9 = arith.cmpi eq, %arg2, %c0_i32_8 : i32
    %10 = arith.extui %9 : i1 to i32
    %c0_i32_9 = arith.constant 0 : i32
    %11 = arith.cmpi ne, %10, %c0_i32_9 : i32
    scf.if %11 {
      %c0_10 = arith.constant 0 : index
      %c0_11 = arith.constant 0 : index
      %12 = vector.load %arg7[%c0_10, %c0_11] : memref<32x64xf32, #tpu.memory_space<vmem>>, vector<32x64xf32>
      %c0_12 = arith.constant 0 : index
      %c0_13 = arith.constant 0 : index
      %13 = vector.load %arg5[%c0_12, %c0_13] : memref<1x64xf32, #tpu.memory_space<vmem>>, vector<1x64xf32>
      %14 = vector.broadcast %13 : vector<1x64xf32> to vector<32x64xf32>
      %15 = arith.addf %12, %14 : vector<32x64xf32>
      %c0_14 = arith.constant 0 : index
      %c0_15 = arith.constant 0 : index
      %16 = vector.load %arg6[%c0_14, %c0_15] : memref<32x64xf32, #tpu.memory_space<vmem>>, vector<32x64xf32>
      tpu.vector_store %arg6[%c0_14, %c0_15], %15 {strides = array<i32>} : memref<32x64xf32, #tpu.memory_space<vmem>>, vector<32x64xf32>,
    } else {
    }
    return
  }
  func.func @transform_0(%arg0: i32, %arg1: i32, %arg2: i32) -> (i32, i32) {
    %c0_i32 = arith.constant 0 : i32
    return %arg0, %arg2 : i32, i32
  }
  func.func @transform_1(%arg0: i32, %arg1: i32, %arg2: i32) -> (i32, i32) {
    %c0_i32 = arith.constant 0 : i32
    return %arg2, %arg1 : i32, i32
  }
  func.func @transform_2(%arg0: i32, %arg1: i32, %arg2: i32) -> (i32, i32) {
    %c0_i32 = arith.constant 0 : i32
    %c0_i32_0 = arith.constant 0 : i32
    return %c0_i32, %arg1 : i32, i32
  }
  func.func @transform_3(%arg0: i32, %arg1: i32, %arg2: i32) -> (i32, i32) {
    %c0_i32 = arith.constant 0 : i32
    return %arg0, %arg1 : i32, i32
  }
}

module attributes {stable_mosaic.version = 11 : i64} {
  func.func @_attn_out_kernel(%arg0: i32, %arg1: i32, %arg2: memref<1x8x32xf32, #tpu.memory_space<vmem>>, %arg3: memref<1x16x64xf32, #tpu.memory_space<vmem>>, %arg4: memref<32x32xf32, #tpu.memory_space<vmem>>, %arg5: memref<1x32xf32, #tpu.memory_space<vmem>>, %arg6: memref<1x8x32xf32, #tpu.memory_space<vmem>>) attributes {dimension_semantics = [#tpu.dimension_semantics<parallel>, #tpu.dimension_semantics<parallel>], iteration_bounds = array<i64: 2, 1>, scalar_prefetch = 0 : i64, scratch_operands = 0 : i64, tpu.core_type = #tpu.core_type<tc>, window_params = [{transform_indices = @transform_0, window_bounds = array<i64: 1, 8, 32>}, {transform_indices = @transform_1, window_bounds = array<i64: 1, 16, 64>}, {pipeline_mode = #tpu.pipeline_mode<synchronous>, transform_indices = @transform_2, window_bounds = array<i64: 32, 32>}, {pipeline_mode = #tpu.pipeline_mode<synchronous>, transform_indices = @transform_3, window_bounds = array<i64: 1, 32>}, {transform_indices = @transform_4, window_bounds = array<i64: 1, 8, 32>}]} {
    %c0 = arith.constant 0 : index
    %c0_0 = arith.constant 0 : index
    %c0_1 = arith.constant 0 : index
    %0 = vector.load %arg2[%c0, %c0_0, %c0_1] : memref<1x8x32xf32, #tpu.memory_space<vmem>>, vector<1x8x32xf32>
    %1 = vector.shape_cast %0 : vector<1x8x32xf32> to vector<8x32xf32>
    %c0_2 = arith.constant 0 : index
    %c0_3 = arith.constant 0 : index
    %c0_4 = arith.constant 0 : index
    %2 = vector.load %arg3[%c0_2, %c0_3, %c0_4] : memref<1x16x64xf32, #tpu.memory_space<vmem>>, vector<1x16x64xf32>
    %3 = vector.shape_cast %2 : vector<1x16x64xf32> to vector<16x64xf32>
    %4 = vector.extract_strided_slice %1 {offsets = [0, 0], sizes = [8, 8], strides = [1, 1]} : vector<8x32xf32> to vector<8x8xf32>
    %5 = vector.extract_strided_slice %3 {offsets = [0, 0], sizes = [16, 8], strides = [1, 1]} : vector<16x64xf32> to vector<16x8xf32>
    %6 = vector.extract_strided_slice %3 {offsets = [0, 32], sizes = [16, 8], strides = [1, 1]} : vector<16x64xf32> to vector<16x8xf32>
    %cst = arith.constant dense<0.000000e+00> : vector<8x16xf32>
    %7 = tpu.matmul %4, %5, %cst {dimension_numbers = #tpu.dot_dimension_numbers<[1], [1], [0], [0], [0, 0, 1, 0], [], []>} : vector<8x8xf32>, vector<16x8xf32>, vector<8x16xf32> -> vector<8x16xf32>
    %cst_5 = arith.constant dense<0xFF800000> : vector<8xf32>
    %8 = vector.multi_reduction <maximumf>, %7, %cst_5 [1] : vector<8x16xf32> to vector<8xf32>
    %9 = vector.shape_cast %8 : vector<8xf32> to vector<8x1xf32>
    %10 = vector.broadcast %9 : vector<8x1xf32> to vector<8x16xf32>
    %11 = arith.subf %7, %10 : vector<8x16xf32>
    %12 = math.exp %11 : vector<8x16xf32>
    %cst_6 = arith.constant dense<0.000000e+00> : vector<8xf32>
    %13 = vector.multi_reduction <add>, %12, %cst_6 [1] : vector<8x16xf32> to vector<8xf32>
    %14 = vector.shape_cast %13 : vector<8xf32> to vector<8x1xf32>
    %15 = tpu.reciprocal %14 {approx = true} : vector<8x1xf32> -> vector<8x1xf32>
    %16 = arith.mulf %14, %15 : vector<8x1xf32>
    %cst_7 = arith.constant 2.000000e+00 : f32
    %17 = vector.broadcast %cst_7 : f32 to vector<8x1xf32>
    %18 = arith.subf %17, %16 : vector<8x1xf32>
    %19 = arith.mulf %15, %18 : vector<8x1xf32>
    %20 = vector.broadcast %19 : vector<8x1xf32> to vector<8x16xf32>
    %21 = arith.mulf %12, %20 : vector<8x16xf32>
    %cst_8 = arith.constant dense<0.000000e+00> : vector<8x8xf32>
    %22 = tpu.matmul %21, %6, %cst_8 {dimension_numbers = #tpu.dot_dimension_numbers<[1], [0], [0], [1], [0, 0, 1, 1], [], []>} : vector<8x16xf32>, vector<16x8xf32>, vector<8x8xf32> -> vector<8x8xf32>
    %23 = vector.extract_strided_slice %1 {offsets = [0, 8], sizes = [8, 8], strides = [1, 1]} : vector<8x32xf32> to vector<8x8xf32>
    %24 = vector.extract_strided_slice %3 {offsets = [0, 8], sizes = [16, 8], strides = [1, 1]} : vector<16x64xf32> to vector<16x8xf32>
    %25 = vector.extract_strided_slice %3 {offsets = [0, 40], sizes = [16, 8], strides = [1, 1]} : vector<16x64xf32> to vector<16x8xf32>
    %cst_9 = arith.constant dense<0.000000e+00> : vector<8x16xf32>
    %26 = tpu.matmul %23, %24, %cst_9 {dimension_numbers = #tpu.dot_dimension_numbers<[1], [1], [0], [0], [0, 0, 1, 0], [], []>} : vector<8x8xf32>, vector<16x8xf32>, vector<8x16xf32> -> vector<8x16xf32>
    %cst_10 = arith.constant dense<0xFF800000> : vector<8xf32>
    %27 = vector.multi_reduction <maximumf>, %26, %cst_10 [1] : vector<8x16xf32> to vector<8xf32>
    %28 = vector.shape_cast %27 : vector<8xf32> to vector<8x1xf32>
    %29 = vector.broadcast %28 : vector<8x1xf32> to vector<8x16xf32>
    %30 = arith.subf %26, %29 : vector<8x16xf32>
    %31 = math.exp %30 : vector<8x16xf32>
    %cst_11 = arith.constant dense<0.000000e+00> : vector<8xf32>
    %32 = vector.multi_reduction <add>, %31, %cst_11 [1] : vector<8x16xf32> to vector<8xf32>
    %33 = vector.shape_cast %32 : vector<8xf32> to vector<8x1xf32>
    %34 = tpu.reciprocal %33 {approx = true} : vector<8x1xf32> -> vector<8x1xf32>
    %35 = arith.mulf %33, %34 : vector<8x1xf32>
    %cst_12 = arith.constant 2.000000e+00 : f32
    %36 = vector.broadcast %cst_12 : f32 to vector<8x1xf32>
    %37 = arith.subf %36, %35 : vector<8x1xf32>
    %38 = arith.mulf %34, %37 : vector<8x1xf32>
    %39 = vector.broadcast %38 : vector<8x1xf32> to vector<8x16xf32>
    %40 = arith.mulf %31, %39 : vector<8x16xf32>
    %cst_13 = arith.constant dense<0.000000e+00> : vector<8x8xf32>
    %41 = tpu.matmul %40, %25, %cst_13 {dimension_numbers = #tpu.dot_dimension_numbers<[1], [0], [0], [1], [0, 0, 1, 1], [], []>} : vector<8x16xf32>, vector<16x8xf32>, vector<8x8xf32> -> vector<8x8xf32>
    %42 = vector.extract_strided_slice %1 {offsets = [0, 16], sizes = [8, 8], strides = [1, 1]} : vector<8x32xf32> to vector<8x8xf32>
    %43 = vector.extract_strided_slice %3 {offsets = [0, 16], sizes = [16, 8], strides = [1, 1]} : vector<16x64xf32> to vector<16x8xf32>
    %44 = vector.extract_strided_slice %3 {offsets = [0, 48], sizes = [16, 8], strides = [1, 1]} : vector<16x64xf32> to vector<16x8xf32>
    %cst_14 = arith.constant dense<0.000000e+00> : vector<8x16xf32>
    %45 = tpu.matmul %42, %43, %cst_14 {dimension_numbers = #tpu.dot_dimension_numbers<[1], [1], [0], [0], [0, 0, 1, 0], [], []>} : vector<8x8xf32>, vector<16x8xf32>, vector<8x16xf32> -> vector<8x16xf32>
    %cst_15 = arith.constant dense<0xFF800000> : vector<8xf32>
    %46 = vector.multi_reduction <maximumf>, %45, %cst_15 [1] : vector<8x16xf32> to vector<8xf32>
    %47 = vector.shape_cast %46 : vector<8xf32> to vector<8x1xf32>
    %48 = vector.broadcast %47 : vector<8x1xf32> to vector<8x16xf32>
    %49 = arith.subf %45, %48 : vector<8x16xf32>
    %50 = math.exp %49 : vector<8x16xf32>
    %cst_16 = arith.constant dense<0.000000e+00> : vector<8xf32>
    %51 = vector.multi_reduction <add>, %50, %cst_16 [1] : vector<8x16xf32> to vector<8xf32>
    %52 = vector.shape_cast %51 : vector<8xf32> to vector<8x1xf32>
    %53 = tpu.reciprocal %52 {approx = true} : vector<8x1xf32> -> vector<8x1xf32>
    %54 = arith.mulf %52, %53 : vector<8x1xf32>
    %cst_17 = arith.constant 2.000000e+00 : f32
    %55 = vector.broadcast %cst_17 : f32 to vector<8x1xf32>
    %56 = arith.subf %55, %54 : vector<8x1xf32>
    %57 = arith.mulf %53, %56 : vector<8x1xf32>
    %58 = vector.broadcast %57 : vector<8x1xf32> to vector<8x16xf32>
    %59 = arith.mulf %50, %58 : vector<8x16xf32>
    %cst_18 = arith.constant dense<0.000000e+00> : vector<8x8xf32>
    %60 = tpu.matmul %59, %44, %cst_18 {dimension_numbers = #tpu.dot_dimension_numbers<[1], [0], [0], [1], [0, 0, 1, 1], [], []>} : vector<8x16xf32>, vector<16x8xf32>, vector<8x8xf32> -> vector<8x8xf32>
    %61 = vector.extract_strided_slice %1 {offsets = [0, 24], sizes = [8, 8], strides = [1, 1]} : vector<8x32xf32> to vector<8x8xf32>
    %62 = vector.extract_strided_slice %3 {offsets = [0, 24], sizes = [16, 8], strides = [1, 1]} : vector<16x64xf32> to vector<16x8xf32>
    %63 = vector.extract_strided_slice %3 {offsets = [0, 56], sizes = [16, 8], strides = [1, 1]} : vector<16x64xf32> to vector<16x8xf32>
    %cst_19 = arith.constant dense<0.000000e+00> : vector<8x16xf32>
    %64 = tpu.matmul %61, %62, %cst_19 {dimension_numbers = #tpu.dot_dimension_numbers<[1], [1], [0], [0], [0, 0, 1, 0], [], []>} : vector<8x8xf32>, vector<16x8xf32>, vector<8x16xf32> -> vector<8x16xf32>
    %cst_20 = arith.constant dense<0xFF800000> : vector<8xf32>
    %65 = vector.multi_reduction <maximumf>, %64, %cst_20 [1] : vector<8x16xf32> to vector<8xf32>
    %66 = vector.shape_cast %65 : vector<8xf32> to vector<8x1xf32>
    %67 = vector.broadcast %66 : vector<8x1xf32> to vector<8x16xf32>
    %68 = arith.subf %64, %67 : vector<8x16xf32>
    %69 = math.exp %68 : vector<8x16xf32>
    %cst_21 = arith.constant dense<0.000000e+00> : vector<8xf32>
    %70 = vector.multi_reduction <add>, %69, %cst_21 [1] : vector<8x16xf32> to vector<8xf32>
    %71 = vector.shape_cast %70 : vector<8xf32> to vector<8x1xf32>
    %72 = tpu.reciprocal %71 {approx = true} : vector<8x1xf32> -> vector<8x1xf32>
    %73 = arith.mulf %71, %72 : vector<8x1xf32>
    %cst_22 = arith.constant 2.000000e+00 : f32
    %74 = vector.broadcast %cst_22 : f32 to vector<8x1xf32>
    %75 = arith.subf %74, %73 : vector<8x1xf32>
    %76 = arith.mulf %72, %75 : vector<8x1xf32>
    %77 = vector.broadcast %76 : vector<8x1xf32> to vector<8x16xf32>
    %78 = arith.mulf %69, %77 : vector<8x16xf32>
    %cst_23 = arith.constant dense<0.000000e+00> : vector<8x8xf32>
    %79 = tpu.matmul %78, %63, %cst_23 {dimension_numbers = #tpu.dot_dimension_numbers<[1], [0], [0], [1], [0, 0, 1, 1], [], []>} : vector<8x16xf32>, vector<16x8xf32>, vector<8x8xf32> -> vector<8x8xf32>
    %80 = tpu.concatenate %22, %41, %60, %79 in 1 : vector<8x8xf32>, vector<8x8xf32>, vector<8x8xf32>, vector<8x8xf32> -> vector<8x32xf32>
    %c0_24 = arith.constant 0 : index
    %c0_25 = arith.constant 0 : index
    %81 = vector.load %arg4[%c0_24, %c0_25] : memref<32x32xf32, #tpu.memory_space<vmem>>, vector<32x32xf32>
    %cst_26 = arith.constant dense<0.000000e+00> : vector<8x32xf32>
    %82 = tpu.matmul %80, %81, %cst_26 {dimension_numbers = #tpu.dot_dimension_numbers<[1], [0], [0], [1], [0, 0, 1, 1], [], []>} : vector<8x32xf32>, vector<32x32xf32>, vector<8x32xf32> -> vector<8x32xf32>
    %c0_27 = arith.constant 0 : index
    %c0_28 = arith.constant 0 : index
    %83 = vector.load %arg5[%c0_27, %c0_28] : memref<1x32xf32, #tpu.memory_space<vmem>>, vector<1x32xf32>
    %84 = vector.broadcast %83 : vector<1x32xf32> to vector<8x32xf32>
    %85 = arith.addf %82, %84 : vector<8x32xf32>
    %c0_29 = arith.constant 0 : index
    %c0_30 = arith.constant 0 : index
    %c0_31 = arith.constant 0 : index
    %86 = vector.load %arg6[%c0_29, %c0_30, %c0_31] : memref<1x8x32xf32, #tpu.memory_space<vmem>>, vector<1x8x32xf32>
    %87 = vector.shape_cast %86 : vector<1x8x32xf32> to vector<8x32xf32>
    %88 = vector.shape_cast %85 : vector<8x32xf32> to vector<1x8x32xf32>
    tpu.vector_store %arg6[%c0_29, %c0_30, %c0_31], %88 {strides = array<i32>} : memref<1x8x32xf32, #tpu.memory_space<vmem>>, vector<1x8x32xf32>,
    return
  }
  func.func @transform_0(%arg0: i32, %arg1: i32) -> (i32, i32, i32) {
    %c0_i32 = arith.constant 0 : i32
    %c0_i32_0 = arith.constant 0 : i32
    return %arg0, %arg1, %c0_i32 : i32, i32, i32
  }
  func.func @transform_1(%arg0: i32, %arg1: i32) -> (i32, i32, i32) {
    %c0_i32 = arith.constant 0 : i32
    %c0_i32_0 = arith.constant 0 : i32
    %c0_i32_1 = arith.constant 0 : i32
    return %arg0, %c0_i32, %c0_i32_0 : i32, i32, i32
  }
  func.func @transform_2(%arg0: i32, %arg1: i32) -> (i32, i32) {
    %c0_i32 = arith.constant 0 : i32
    %c0_i32_0 = arith.constant 0 : i32
    %c0_i32_1 = arith.constant 0 : i32
    return %c0_i32, %c0_i32_0 : i32, i32
  }
  func.func @transform_3(%arg0: i32, %arg1: i32) -> (i32, i32) {
    %c0_i32 = arith.constant 0 : i32
    %c0_i32_0 = arith.constant 0 : i32
    %c0_i32_1 = arith.constant 0 : i32
    return %c0_i32, %c0_i32_0 : i32, i32
  }
  func.func @transform_4(%arg0: i32, %arg1: i32) -> (i32, i32, i32) {
    %c0_i32 = arith.constant 0 : i32
    %c0_i32_0 = arith.constant 0 : i32
    return %arg0, %arg1, %c0_i32 : i32, i32, i32
  }
}

</mosaic_0001>

<llo_original>
// kernel: cross_attention_forward.3
$region0: #{cross_attention_forward.3}
  #allocation0 [shape = 'u32[]', space=smem, size = 0x4, offset = 0x4, fixed_abs, tag = 'smem constant byte address 0x4 - core index']
  #allocation1 [shape = 'u32[144,128]{1,0:T(1,128)}', space=vmem, size = 0x12000, scoped, tag = 'internal scratch']
  #allocation2 [shape = 'f32[16,32]{1,0:T(8,128)}', space=vmem, size = 0x2000, scoped, tag = 'scratch operand']
  %s0 = inlined_call_operand.vmem [shape: f32[16,32], index: 0, kind: input, shape index: {}]
  %s1 = inlined_call_operand.hbm [shape: f32[32,32], index: 1, kind: input, shape index: {}]
  %s2 = inlined_call_operand.vmem [shape: f32[1,32], index: 2, kind: input, shape index: {}]
  %s3 = inlined_call_operand.vmem [shape: f32[16,32], index: 3, kind: output, shape index: {}]
  %s4 = sld [smem:[#allocation0]]
  $region34: #{cross_attention_forward.3} parent=0
    _
  %s6 = ssub.s32 1, %s4
  %s7 = scalar_select 0, %s6, %s4
  $region1: #{cross_attention_forward.3} parent=0
    #allocation3 [shape = 'u8[16384]{0}', space=vmem, size = 0x4000, scoped, tag = 'input window, operand 1, single buffered']
    #allocation4 [shape = 's32[1]{0}', space=sflag, size = 0x4, scoped, tag = 'scoped memory for cross_attention_forward.3']
    %8 = vsyncpa [#allocation4], 0
    // Predicated region
    $region2: #{cross_attention_forward.3} parent=1 // pred_check
      _
    $region3: #{cross_attention_forward.3} parent=1 // pred_check_branch
      %10 = sbr.rel (0) target = $region5
    $region4: #{cross_attention_forward.3} parent=1 // pred_region
      _
    $region5: #{cross_attention_forward.3} parent=1 // pred_fallthru
      _
    // Predicated region
    $region6: #{cross_attention_forward.3} parent=1 // pred_check
      _
    $region7: #{cross_attention_forward.3} parent=1 // pred_check_branch
      %12 = sbr.rel (0) target = $region9
    $region8: #{cross_attention_forward.3} parent=1 // pred_region
      %s14 = ssub.s32 512, 512
      %15 = vsyncadd [#allocation4], %s14
      %s16 = sshll.u32 [#allocation3], 4
      %s17 = int_to_ptr.vmem [resolvable:$true] %s16
      %22 = dma.hbm_to_vmem [thread:$0]  %s1, 512, %s17, [#allocation4], 128, 128, 8
    $region9: #{cross_attention_forward.3} parent=1 // pred_fallthru
      _
    // Predicated region
    $region10: #{cross_attention_forward.3} parent=1 // pred_check
      _
    $region11: #{cross_attention_forward.3} parent=1 // pred_check_branch
      %24 = sbr.rel (0) target = $region13
    $region12: #{cross_attention_forward.3} parent=1 // pred_region
      _
    $region13: #{cross_attention_forward.3} parent=1 // pred_fallthru
      _
    // Predicated region
    $region14: #{cross_attention_forward.3} parent=1 // pred_check
      _
    $region15: #{cross_attention_forward.3} parent=1 // pred_check_branch
      %26 = sbr.rel (0) target = $region17
    $region16: #{cross_attention_forward.3} parent=1 // pred_region
      %27 = dma.done [#allocation4], 512
    $region17: #{cross_attention_forward.3} parent=1 // pred_fallthru
      _
    %p28 = scmp.eq.s32.totalorder 0, 0
    // Predicated region
    $region18: #{cross_attention_forward.3} parent=1 // pred_check
      %p29 = pneg %p28
    $region19: #{cross_attention_forward.3} parent=1 // pred_check_branch
      %31 = sbr.rel (%p29) target = $region21
    $region20: #{cross_attention_forward.3} parent=1 // pred_region
      %vm32 = vcmask 261120
      %33 = vst.msk [vmem:[#allocation2] sm:$0xff] %vm32, 0.0
      %34 = vst.msk [vmem:[#allocation2 + $0x8] sm:$0xff] %vm32, 0.0
    $region21: #{cross_attention_forward.3} parent=1 // pred_fallthru
      _
    %v35 = vld [vmem:[#allocation2] sm:$0xff]
    %v36 = vld [vmem:[#allocation2 + $0x8] sm:$0xff]
    %v37 = vld [vmem:[%s0] sm:$0xff]
    %v38 = vld [vmem:[%s0 + $0x8] sm:$0xff]
    %v39 = vld [vmem:[#allocation3] sm:$0xff]
    %v40 = vld [vmem:[#allocation3 + $0x8] sm:$0xff]
    %v41 = vld [vmem:[#allocation3 + $0x10] sm:$0xff]
    %v42 = vld [vmem:[#allocation3 + $0x18] sm:$0xff]
    %vm43 = vcmask 261120
    %v45 = vsel %vm43, %v37, 0
    %v48 = vsel %vm43, %v38, 0
    %50 = vmatprep.subr.mxu0 0.0
    %51 = vmatpush1.msra.mxu0 %v39
    %52 = vmatprep.subr.mxu0 0.0
    %53 = vmatpush1.msra.mxu0 %v40
    %54 = vmatprep.subr.mxu0 0.0
    %55 = vmatpush1.msra.mxu0 %v41
    %56 = vmatprep.subr.mxu0 0.0
    %57 = vmatpush1.msra.mxu0 %v42
    %58 = vmatprep.subr.mxu0 0.0
    %59 = vmatpush1.msra.mxu0 0.0
    %60 = vmatprep.subr.mxu0 0.0
    %61 = vmatpush1.msra.mxu0 0.0
    %62 = vmatprep.subr.mxu0 0.0
    %63 = vmatpush1.msra.mxu0 0.0
    %64 = vmatprep.subr.mxu0 0.0
    %65 = vmatpush1.msra.mxu0 0.0
    %66 = vmatprep.subr.mxu0 0.0
    %67 = vmatpush1.msra.mxu0 0.0
    %68 = vmatprep.subr.mxu0 0.0
    %69 = vmatpush1.msra.mxu0 0.0
    %70 = vmatprep.subr.mxu0 0.0
    %71 = vmatpush1.msra.mxu0 0.0
    %72 = vmatprep.subr.mxu0 0.0
    %73 = vmatpush1.msra.mxu0 0.0
    %74 = vmatprep.subr.mxu0 0.0
    %75 = vmatpush1.msra.mxu0 0.0
    %76 = vmatprep.subr.mxu0 0.0
    %77 = vmatpush1.msra.mxu0 0.0
    %78 = vmatprep.subr.mxu0 0.0
    %79 = vmatpush1.msra.mxu0 0.0
    %80 = vmatprep.subr.mxu0 0.0
    %81 = vmatpush1.msra.mxu0 0.0
    %82 = vmatprep.subr.mxu0 0.0
    %83 = vmatpush1.msra.mxu0 0.0
    %84 = vmatprep.subr.mxu0 0.0
    %85 = vmatpush1.msra.mxu0 0.0
    %86 = vmatprep.subr.mxu0 0.0
    %87 = vmatpush1.msra.mxu0 0.0
    %88 = vmatprep.subr.mxu0 0.0
    %89 = vmatpush1.msra.mxu0 0.0
    %90 = vmatprep.subr.mxu0 0.0
    %91 = vmatpush1.msra.mxu0 0.0
    %92 = vmatprep.subr.mxu0 0.0
    %93 = vmatpush1.msra.mxu0 0.0
    %94 = vmatprep.subr.mxu0 0.0
    %95 = vmatpush1.msra.mxu0 0.0
    %96 = vmatprep.subr.mxu0 0.0
    %97 = vmatpush1.msra.mxu0 0.0
    %98 = vmatprep.subr.mxu0 0.0
    %99 = vmatpush1.msra.mxu0 0.0
    %100 = vmatprep.subr.mxu0 0.0
    %101 = vmatpush1.msra.mxu0 0.0
    %102 = vmatprep.subr.mxu0 0.0
    %103 = vmatpush1.msra.mxu0 0.0
    %104 = vmatprep.subr.mxu0 0.0
    %105 = vmatpush1.msra.mxu0 0.0
    %106 = vmatprep.subr.mxu0 0.0
    %107 = vmatpush1.msra.mxu0 0.0
    %108 = vmatprep.subr.mxu0 0.0
    %109 = vmatpush1.msra.mxu0 0.0
    %110 = vmatprep.subr.mxu0 0.0
    %111 = vmatpush1.msra.mxu0 0.0
    %112 = vmatprep.subr.mxu0 0.0
    %113 = vmatpush1.msra.mxu0 0.0
    %114 = vmatprep.mubr.f32.mxu0 0.0
    %115 = vmatmul.mubr.f32.gmra.mrb[0].mxu0 %v45
    %v116 = vpop.f32.mrb[0].mxu0
    %v117 = vadd.f32 0.0, %v116
    %v118 = vpop.f32.mrb[0].mxu0
    %119 = vmatprep.mubr.f32.mxu0 0.0
    %120 = vmatmul.mubr.f32.gmra.mrb[0].mxu0 %v48
    %v121 = vpop.f32.mrb[0].mxu0
    %v122 = vadd.f32 0.0, %v121
    %v123 = vpop.f32.mrb[0].mxu0
    %124 = vdwg.mxu0
    %v125 = vadd.f32 %v35, %v117
    %v126 = vadd.f32 %v36, %v122
    %127 = vst.msk [vmem:[#allocation2] sm:$0xff] %vm43, %v125
    %128 = vst.msk [vmem:[#allocation2 + $0x8] sm:$0xff] %vm43, %v126
    // Predicated region
    $region22: #{cross_attention_forward.3} parent=1 // pred_check
      %p129 = pneg %p28
    $region23: #{cross_attention_forward.3} parent=1 // pred_check_branch
      %131 = sbr.rel (%p129) target = $region25
    $region24: #{cross_attention_forward.3} parent=1 // pred_region
      %v132 = vld [vmem:[#allocation2] sm:$0xff]
      %v133 = vld [vmem:[#allocation2 + $0x8] sm:$0xff]
      %v134 = vld [vmem:[%s2] sm:$0x1]
      %v136 = vlaneseq
      %v137 = vshrl.u32 %v136, 7
      %v138 = vsub.s32 0, %v137
      %v139 = vrot.slane %v134, %v138
      %v141 = vadd.f32 %v132, %v139
      %v142 = vadd.f32 %v133, %v139
      %143 = vst.msk [vmem:[%s3] sm:$0xff] %vm43, %v141
      %144 = vst.msk [vmem:[%s3 + $0x8] sm:$0xff] %vm43, %v142
    $region25: #{cross_attention_forward.3} parent=1 // pred_fallthru
      _
    // Predicated region
    $region26: #{cross_attention_forward.3} parent=1 // pred_check
      _
    $region27: #{cross_attention_forward.3} parent=1 // pred_check_branch
      %146 = sbr.rel (0) target = $region29
    $region28: #{cross_attention_forward.3} parent=1 // pred_region
      _
    $region29: #{cross_attention_forward.3} parent=1 // pred_fallthru
      _
    // Predicated region
    $region30: #{cross_attention_forward.3} parent=1 // pred_check
      _
    $region31: #{cross_attention_forward.3} parent=1 // pred_check_branch
      %148 = sbr.rel (0) target = $region33
    $region32: #{cross_attention_forward.3} parent=1 // pred_region
      _
    $region33: #{cross_attention_forward.3} parent=1 // pred_fallthru
      _
    %149 = vsyncpa [#allocation4], 1

// kernel: cross_attention_forward.4
$region0: #{cross_attention_forward.4}
  #allocation0 [shape = 'u32[]', space=smem, size = 0x4, offset = 0x4, fixed_abs, tag = 'smem constant byte address 0x4 - core index']
  #allocation1 [shape = 'u32[144,128]{1,0:T(1,128)}', space=vmem, size = 0x12000, scoped, tag = 'internal scratch']
  #allocation2 [shape = 'f32[32,64]{1,0:T(8,128)}', space=vmem, size = 0x4000, scoped, tag = 'scratch operand']
  %s0 = inlined_call_operand.vmem [shape: f32[32,24], index: 0, kind: input, shape index: {}]
  %s1 = inlined_call_operand.vmem [shape: f32[24,64], index: 1, kind: input, shape index: {}]
  %s2 = inlined_call_operand.vmem [shape: f32[1,64], index: 2, kind: input, shape index: {}]
  %s3 = inlined_call_operand.vmem [shape: f32[32,64], index: 3, kind: output, shape index: {}]
  %s4 = sld [smem:[#allocation0]]
  $region30: #{cross_attention_forward.4} parent=0
    _
  %s6 = ssub.s32 1, %s4
  %s7 = scalar_select 0, %s6, %s4
  // Predicated region
  $region2: #{cross_attention_forward.4} parent=0 // pred_check
    _
  $region3: #{cross_attention_forward.4} parent=0 // pred_check_branch
    %9 = sbr.rel (0) target = $region5
  $region4: #{cross_attention_forward.4} parent=0 // pred_region
    _
  $region5: #{cross_attention_forward.4} parent=0 // pred_fallthru
    _
  // Predicated region
  $region6: #{cross_attention_forward.4} parent=0 // pred_check
    _
  $region7: #{cross_attention_forward.4} parent=0 // pred_check_branch
    %11 = sbr.rel (0) target = $region9
  $region8: #{cross_attention_forward.4} parent=0 // pred_region
    _
  $region9: #{cross_attention_forward.4} parent=0 // pred_fallthru
    _
  // Predicated region
  $region10: #{cross_attention_forward.4} parent=0 // pred_check
    _
  $region11: #{cross_attention_forward.4} parent=0 // pred_check_branch
    %13 = sbr.rel (0) target = $region13
  $region12: #{cross_attention_forward.4} parent=0 // pred_region
    _
  $region13: #{cross_attention_forward.4} parent=0 // pred_fallthru
    _
  %p14 = scmp.eq.s32.totalorder 0, 0
  // Predicated region
  $region14: #{cross_attention_forward.4} parent=0 // pred_check
    %p15 = pneg %p14
  $region15: #{cross_attention_forward.4} parent=0 // pred_check_branch
    %17 = sbr.rel (%p15) target = $region17
  $region16: #{cross_attention_forward.4} parent=0 // pred_region
    %vm18 = vcmask 523264
    %19 = vst.msk [vmem:[#allocation2] sm:$0xff] %vm18, 0.0
    %20 = vst.msk [vmem:[#allocation2 + $0x8] sm:$0xff] %vm18, 0.0
    %21 = vst.msk [vmem:[#allocation2 + $0x10] sm:$0xff] %vm18, 0.0
    %22 = vst.msk [vmem:[#allocation2 + $0x18] sm:$0xff] %vm18, 0.0
  $region17: #{cross_attention_forward.4} parent=0 // pred_fallthru
    _
  %v23 = vld [vmem:[#allocation2] sm:$0xff]
  %v24 = vld [vmem:[#allocation2 + $0x8] sm:$0xff]
  %v25 = vld [vmem:[#allocation2 + $0x10] sm:$0xff]
  %v26 = vld [vmem:[#allocation2 + $0x18] sm:$0xff]
  %v27 = vld [vmem:[%s0] sm:$0xff]
  %v28 = vld [vmem:[%s0 + $0x8] sm:$0xff]
  %v29 = vld [vmem:[%s0 + $0x10] sm:$0xff]
  %v30 = vld [vmem:[%s0 + $0x18] sm:$0xff]
  %v31 = vld [vmem:[%s1] sm:$0xff]
  %v32 = vld [vmem:[%s1 + $0x8] sm:$0xff]
  %v33 = vld [vmem:[%s1 + $0x10] sm:$0xff]
  %vm34 = vcmask 195584
  %v36 = vsel %vm34, %v27, 0
  %v39 = vsel %vm34, %v28, 0
  %v42 = vsel %vm34, %v29, 0
  %v45 = vsel %vm34, %v30, 0
  %47 = vmatprep.subr.mxu0 0.0
  %48 = vmatpush1.msra.mxu0 %v31
  %49 = vmatprep.subr.mxu0 0.0
  %50 = vmatpush1.msra.mxu0 %v32
  %51 = vmatprep.subr.mxu0 0.0
  %52 = vmatpush1.msra.mxu0 %v33
  %53 = vmatprep.subr.mxu0 0.0
  %54 = vmatpush1.msra.mxu0 0.0
  %55 = vmatprep.subr.mxu0 0.0
  %56 = vmatpush1.msra.mxu0 0.0
  %57 = vmatprep.subr.mxu0 0.0
  %58 = vmatpush1.msra.mxu0 0.0
  %59 = vmatprep.subr.mxu0 0.0
  %60 = vmatpush1.msra.mxu0 0.0
  %61 = vmatprep.subr.mxu0 0.0
  %62 = vmatpush1.msra.mxu0 0.0
  %63 = vmatprep.subr.mxu0 0.0
  %64 = vmatpush1.msra.mxu0 0.0
  %65 = vmatprep.subr.mxu0 0.0
  %66 = vmatpush1.msra.mxu0 0.0
  %67 = vmatprep.subr.mxu0 0.0
  %68 = vmatpush1.msra.mxu0 0.0
  %69 = vmatprep.subr.mxu0 0.0
  %70 = vmatpush1.msra.mxu0 0.0
  %71 = vmatprep.subr.mxu0 0.0
  %72 = vmatpush1.msra.mxu0 0.0
  %73 = vmatprep.subr.mxu0 0.0
  %74 = vmatpush1.msra.mxu0 0.0
  %75 = vmatprep.subr.mxu0 0.0
  %76 = vmatpush1.msra.mxu0 0.0
  %77 = vmatprep.subr.mxu0 0.0
  %78 = vmatpush1.msra.mxu0 0.0
  %79 = vmatprep.subr.mxu0 0.0
  %80 = vmatpush1.msra.mxu0 0.0
  %81 = vmatprep.subr.mxu0 0.0
  %82 = vmatpush1.msra.mxu0 0.0
  %83 = vmatprep.subr.mxu0 0.0
  %84 = vmatpush1.msra.mxu0 0.0
  %85 = vmatprep.subr.mxu0 0.0
  %86 = vmatpush1.msra.mxu0 0.0
  %87 = vmatprep.subr.mxu0 0.0
  %88 = vmatpush1.msra.mxu0 0.0
  %89 = vmatprep.subr.mxu0 0.0
  %90 = vmatpush1.msra.mxu0 0.0
  %91 = vmatprep.subr.mxu0 0.0
  %92 = vmatpush1.msra.mxu0 0.0
  %93 = vmatprep.subr.mxu0 0.0
  %94 = vmatpush1.msra.mxu0 0.0
  %95 = vmatprep.subr.mxu0 0.0
  %96 = vmatpush1.msra.mxu0 0.0
  %97 = vmatprep.subr.mxu0 0.0
  %98 = vmatpush1.msra.mxu0 0.0
  %99 = vmatprep.subr.mxu0 0.0
  %100 = vmatpush1.msra.mxu0 0.0
  %101 = vmatprep.subr.mxu0 0.0
  %102 = vmatpush1.msra.mxu0 0.0
  %103 = vmatprep.subr.mxu0 0.0
  %104 = vmatpush1.msra.mxu0 0.0
  %105 = vmatprep.subr.mxu0 0.0
  %106 = vmatpush1.msra.mxu0 0.0
  %107 = vmatprep.subr.mxu0 0.0
  %108 = vmatpush1.msra.mxu0 0.0
  %109 = vmatprep.subr.mxu0 0.0
  %110 = vmatpush1.msra.mxu0 0.0
  %111 = vmatprep.mubr.f32.mxu0 0.0
  %112 = vmatmul.mubr.f32.gmra.mrb[0].mxu0 %v36
  %v113 = vpop.f32.mrb[0].mxu0
  %v114 = vadd.f32 0.0, %v113
  %v115 = vpop.f32.mrb[0].mxu0
  %116 = vmatprep.mubr.f32.mxu0 0.0
  %117 = vmatmul.mubr.f32.gmra.mrb[0].mxu0 %v39
  %v118 = vpop.f32.mrb[0].mxu0
  %v119 = vadd.f32 0.0, %v118
  %v120 = vpop.f32.mrb[0].mxu0
  %121 = vmatprep.mubr.f32.mxu0 0.0
  %122 = vmatmul.mubr.f32.gmra.mrb[0].mxu0 %v42
  %v123 = vpop.f32.mrb[0].mxu0
  %v124 = vadd.f32 0.0, %v123
  %v125 = vpop.f32.mrb[0].mxu0
  %126 = vmatprep.mubr.f32.mxu0 0.0
  %127 = vmatmul.mubr.f32.gmra.mrb[0].mxu0 %v45
  %v128 = vpop.f32.mrb[0].mxu0
  %v129 = vadd.f32 0.0, %v128
  %v130 = vpop.f32.mrb[0].mxu0
  %131 = vdwg.mxu0
  %v132 = vadd.f32 %v23, %v114
  %v133 = vadd.f32 %v24, %v119
  %v134 = vadd.f32 %v25, %v124
  %v135 = vadd.f32 %v26, %v129
  %vm136 = vcmask 523264
  %137 = vst.msk [vmem:[#allocation2] sm:$0xff] %vm136, %v132
  %138 = vst.msk [vmem:[#allocation2 + $0x8] sm:$0xff] %vm136, %v133
  %139 = vst.msk [vmem:[#allocation2 + $0x10] sm:$0xff] %vm136, %v134
  %140 = vst.msk [vmem:[#allocation2 + $0x18] sm:$0xff] %vm136, %v135
  // Predicated region
  $region18: #{cross_attention_forward.4} parent=0 // pred_check
    %p141 = pneg %p14
  $region19: #{cross_attention_forward.4} parent=0 // pred_check_branch
    %143 = sbr.rel (%p141) target = $region21
  $region20: #{cross_attention_forward.4} parent=0 // pred_region
    %v144 = vld [vmem:[#allocation2] sm:$0xff]
    %v145 = vld [vmem:[#allocation2 + $0x8] sm:$0xff]
    %v146 = vld [vmem:[#allocation2 + $0x10] sm:$0xff]
    %v147 = vld [vmem:[#allocation2 + $0x18] sm:$0xff]
    %v148 = vld [vmem:[%s2] sm:$0x1]
    %v150 = vlaneseq
    %v151 = vshrl.u32 %v150, 7
    %v152 = vsub.s32 0, %v151
    %v153 = vrot.slane %v148, %v152
    %v155 = vadd.f32 %v144, %v153
    %v156 = vadd.f32 %v145, %v153
    %v157 = vadd.f32 %v146, %v153
    %v158 = vadd.f32 %v147, %v153
    %159 = vst.msk [vmem:[%s3] sm:$0xff] %vm136, %v155
    %160 = vst.msk [vmem:[%s3 + $0x8] sm:$0xff] %vm136, %v156
    %161 = vst.msk [vmem:[%s3 + $0x10] sm:$0xff] %vm136, %v157
    %162 = vst.msk [vmem:[%s3 + $0x18] sm:$0xff] %vm136, %v158
  $region21: #{cross_attention_forward.4} parent=0 // pred_fallthru
    _
  // Predicated region
  $region22: #{cross_attention_forward.4} parent=0 // pred_check
    _
  $region23: #{cross_attention_forward.4} parent=0 // pred_check_branch
    %164 = sbr.rel (0) target = $region25
  $region24: #{cross_attention_forward.4} parent=0 // pred_region
    _
  $region25: #{cross_attention_forward.4} parent=0 // pred_fallthru
    _
  // Predicated region
  $region26: #{cross_attention_forward.4} parent=0 // pred_check
    _
  $region27: #{cross_attention_forward.4} parent=0 // pred_check_branch
    %166 = sbr.rel (0) target = $region29
  $region28: #{cross_attention_forward.4} parent=0 // pred_region
    _
  $region29: #{cross_attention_forward.4} parent=0 // pred_fallthru
    _

// kernel: cross_attention_forward.5
$region0: #{cross_attention_forward.5}
  #allocation0 [shape = 'u32[]', space=smem, size = 0x4, offset = 0x4, fixed_abs, tag = 'smem constant byte address 0x4 - core index']
  #allocation1 [shape = 'u32[144,128]{1,0:T(1,128)}', space=vmem, size = 0x12000, scoped, tag = 'internal scratch']
  %s0 = inlined_call_operand.vmem [shape: f32[2,8,32], index: 0, kind: input, shape index: {}]
  %s1 = inlined_call_operand.vmem [shape: f32[2,16,64], index: 1, kind: input, shape index: {}]
  %s2 = inlined_call_operand.vmem [shape: f32[32,32], index: 2, kind: input, shape index: {}]
  %s3 = inlined_call_operand.vmem [shape: f32[1,32], index: 3, kind: input, shape index: {}]
  %s4 = inlined_call_operand.hbm [shape: f32[2,8,32], index: 4, kind: output, shape index: {}]
  %s5 = sld [smem:[#allocation0]]
  $region49: #{cross_attention_forward.5} parent=0
    _
  %s7 = ssub.s32 1, %s5
  %s8 = scalar_select 0, %s7, %s5
  $region1: #{cross_attention_forward.5} parent=0
    #allocation2 [shape = 'u8[8192]{0}', space=vmem, size = 0x2000, scoped, tag = 'output window, operand 0']
    #allocation3 [shape = 's32[2]{0}', space=sflag, size = 0x8, scoped, tag = 'scoped memory for cross_attention_forward.5']
    %9 = vsyncpa [#allocation3], 0
    %s10 = scalar_lea.sflag [#allocation3], 1
    %11 = vsyncpa %s10, 0
    loop: start=0, step=1, limit=4
    $region2: #{cross_attention_forward.5} parent=1 // loop_pre_header
      _
    $region3: #{cross_attention_forward.5} parent=1 // loop_header
      %s13 = sphi 0, %s17
      %p14 = scmp.ge.s32.totalorder %s13, 4
      %s20 = sphi 0, %s32
      %s21 = sphi 0, %s28
      %s22 = sphi 0, %s20
      %s23 = sphi 0, %s21
      %s24 = sphi 0, %s22
      %s25 = sphi 0, %s23
      %s37 = sphi 0, %s39
      %s40 = sphi 0, %s37
      %s41 = sphi 0, %s40
      %s57 = sphi 0, %s41
      %s63 = sphi 0, %s65
      %s66 = sphi 0, %s63
      %s67 = sphi 0, %s66
      %s83 = sphi 0, %s67
      %s87 = sphi 0, %s87
      %s89 = sphi 0, %s87
      %s90 = sphi 0, %s89
      %s104 = sphi 0, %s90
      %s108 = sphi 0, %s108
      %s110 = sphi 0, %s108
      %s111 = sphi 0, %s110
      %s125 = sphi 0, %s111
      %s133 = sphi 0, %s135
      %s136 = sphi 0, %s133
      %s137 = sphi 0, %s136
      %s153 = sphi 0, %s137
    $region4: #{cross_attention_forward.5} parent=1 // loop_header_branch
      %16 = sbr.rel (%p14) target = $region8
    $region5: #{cross_attention_forward.5} parent=1 // loop_body
      %s18 = ssub.s32 %s13, 1
      %s19 = ssub.s32 %s13, 2
      %s26 = sadd.s32 1, %s21
      %p27 = scmp.ge.s32.totalorder %s26, 1
      %s28 = scalar_select %p27, 0, %s26
      %s29 = sadd.s32 1, %s20
      %s30 = scalar_select %p27, %s29, %s20
      %p31 = scmp.ge.s32.totalorder %s30, 2
      %s32 = scalar_select %p31, 0, %s30
      %s33 = ssub.s32 %s20, %s32
      %s34 = ssub.s32 %s21, %s28
      %s35 = sor.u32 %s33, %s34
      %p36 = scmp.eq.s32.totalorder %s35, 0
      %s38 = sadd.s32 %s37, 1
      %s39 = scalar_select %p36, %s37, %s38
      %p42 = pneg %p36
      %p43 = scmp.eq.s32.totalorder %s13, 1
      %p44 = por %p42, %p43
      %p45 = scmp.ne.s32.totalorder %s37, %s40
      %p46 = scmp.eq.s32.totalorder %s13, 0
      %p47 = por %p45, %p46
      %p48 = scmp.ne.s32.totalorder %s37, %s40
      %p49 = scmp.eq.s32.totalorder %s18, 1
      %p50 = por %p48, %p49
      %p51 = scmp.ne.s32.totalorder %s40, %s41
      %p52 = scmp.eq.s32.totalorder %s18, 0
      %p53 = por %p51, %p52
      %p54 = scmp.ne.s32.totalorder %s40, %s41
      %p55 = scmp.eq.s32.totalorder %s19, 1
      %p56 = por %p54, %p55
      %p58 = scmp.ne.s32.totalorder %s41, %s57
      %p59 = scmp.eq.s32.totalorder %s19, 0
      %p60 = por %p58, %p59
      %s61 = ssub.s32 %s20, %s32
      %p62 = scmp.eq.s32.totalorder %s61, 0
      %s64 = sadd.s32 %s63, 1
      %s65 = scalar_select %p62, %s63, %s64
      %p68 = pneg %p62
      %p69 = scmp.eq.s32.totalorder %s13, 1
      %p70 = por %p68, %p69
      %p71 = scmp.ne.s32.totalorder %s63, %s66
      %p72 = scmp.eq.s32.totalorder %s13, 0
      %p73 = por %p71, %p72
      %p74 = scmp.ne.s32.totalorder %s63, %s66
      %p75 = scmp.eq.s32.totalorder %s18, 1
      %p76 = por %p74, %p75
      %p77 = scmp.ne.s32.totalorder %s66, %s67
      %p78 = scmp.eq.s32.totalorder %s18, 0
      %p79 = por %p77, %p78
      %p80 = scmp.ne.s32.totalorder %s66, %s67
      %p81 = scmp.eq.s32.totalorder %s19, 1
      %p82 = por %p80, %p81
      %p84 = scmp.ne.s32.totalorder %s67, %s83
      %p85 = scmp.eq.s32.totalorder %s19, 0
      %p86 = por %p84, %p85
      %s88 = sadd.s32 %s87, 1
      %p91 = scmp.eq.s32.totalorder %s13, 1
      %p92 = scmp.ne.s32.totalorder %s87, %s89
      %p93 = scmp.eq.s32.totalorder %s13, 0
      %p94 = por %p92, %p93
      %p95 = scmp.ne.s32.totalorder %s87, %s89
      %p96 = scmp.eq.s32.totalorder %s18, 1
      %p97 = por %p95, %p96
      %p98 = scmp.ne.s32.totalorder %s89, %s90
      %p99 = scmp.eq.s32.totalorder %s18, 0
      %p100 = por %p98, %p99
      %p101 = scmp.ne.s32.totalorder %s89, %s90
      %p102 = scmp.eq.s32.totalorder %s19, 1
      %p103 = por %p101, %p102
      %p105 = scmp.ne.s32.totalorder %s90, %s104
      %p106 = scmp.eq.s32.totalorder %s19, 0
      %p107 = por %p105, %p106
      %s109 = sadd.s32 %s108, 1
      %p112 = scmp.eq.s32.totalorder %s13, 1
      %p113 = scmp.ne.s32.totalorder %s108, %s110
      %p114 = scmp.eq.s32.totalorder %s13, 0
      %p115 = por %p113, %p114
      %p116 = scmp.ne.s32.totalorder %s108, %s110
      %p117 = scmp.eq.s32.totalorder %s18, 1
      %p118 = por %p116, %p117
      %p119 = scmp.ne.s32.totalorder %s110, %s111
      %p120 = scmp.eq.s32.totalorder %s18, 0
      %p121 = por %p119, %p120
      %p122 = scmp.ne.s32.totalorder %s110, %s111
      %p123 = scmp.eq.s32.totalorder %s19, 1
      %p124 = por %p122, %p123
      %p126 = scmp.ne.s32.totalorder %s111, %s125
      %p127 = scmp.eq.s32.totalorder %s19, 0
      %p128 = por %p126, %p127
      %s129 = ssub.s32 %s20, %s32
      %s130 = ssub.s32 %s21, %s28
      %s131 = sor.u32 %s129, %s130
      %p132 = scmp.eq.s32.totalorder %s131, 0
      %s134 = sadd.s32 %s133, 1
      %s135 = scalar_select %p132, %s133, %s134
      %p138 = pneg %p132
      %p139 = scmp.eq.s32.totalorder %s13, 1
      %p140 = por %p138, %p139
      %p141 = scmp.ne.s32.totalorder %s133, %s136
      %p142 = scmp.eq.s32.totalorder %s13, 0
      %p143 = por %p141, %p142
      %p144 = scmp.ne.s32.totalorder %s133, %s136
      %p145 = scmp.eq.s32.totalorder %s18, 1
      %p146 = por %p144, %p145
      %p147 = scmp.ne.s32.totalorder %s136, %s137
      %p148 = scmp.eq.s32.totalorder %s18, 0
      %p149 = por %p147, %p148
      %p150 = scmp.ne.s32.totalorder %s136, %s137
      %p151 = scmp.eq.s32.totalorder %s19, 1
      %p152 = por %p150, %p151
      %p154 = scmp.ne.s32.totalorder %s137, %s153
      %p155 = scmp.eq.s32.totalorder %s19, 0
      %p156 = por %p154, %p155
      %p157 = scmp.le.s32.totalorder 1, %s13
      %p158 = scmp.lt.s32.totalorder %s13, 3
      %p159 = pnand %p157, %p158
      %p160 = pneg %p159
      // Predicated region
      $region9: #{cross_attention_forward.5} parent=5 // pred_check
        _
      $region10: #{cross_attention_forward.5} parent=5 // pred_check_branch
        %162 = sbr.rel (%p159) target = $region12
      $region11: #{cross_attention_forward.5} parent=5 // pred_region
        %s163 = ssub.s32 %s13, 1
        // Predicated region
        $region13: #{cross_attention_forward.5} parent=11 // pred_check
          %p164 = pneg %p100
        $region14: #{cross_attention_forward.5} parent=11 // pred_check_branch
          %166 = sbr.rel (%p164) target = $region16
        $region15: #{cross_attention_forward.5} parent=11 // pred_region
          _
        $region16: #{cross_attention_forward.5} parent=11 // pred_fallthru
          _
        // Predicated region
        $region17: #{cross_attention_forward.5} parent=11 // pred_check
          %p167 = pneg %p121
        $region18: #{cross_attention_forward.5} parent=11 // pred_check_branch
          %169 = sbr.rel (%p167) target = $region20
        $region19: #{cross_attention_forward.5} parent=11 // pred_region
          _
        $region20: #{cross_attention_forward.5} parent=11 // pred_fallthru
          _
      $region12: #{cross_attention_forward.5} parent=5 // pred_fallthru
        _
      %p170 = scmp.lt.s32.totalorder %s13, 2
      // Predicated region
      $region21: #{cross_attention_forward.5} parent=5 // pred_check
        %p171 = pneg %p170
      $region22: #{cross_attention_forward.5} parent=5 // pred_check_branch
        %173 = sbr.rel (%p171) target = $region24
      $region23: #{cross_attention_forward.5} parent=5 // pred_region
        // Predicated region
        $region25: #{cross_attention_forward.5} parent=23 // pred_check
          %p174 = pneg %p47
        $region26: #{cross_attention_forward.5} parent=23 // pred_check_branch
          %176 = sbr.rel (%p174) target = $region28
        $region27: #{cross_attention_forward.5} parent=23 // pred_region
          %p177 = scmp.lt.s32.totalorder %s20, 1
          %s178 = scalar_select %p177, %s20, 1
          %p179 = scmp.lt.s32.totalorder %s21, 0
          %s180 = scalar_select %p179, %s21, 0
          %s181 = sadd.s32 %s180, %s178
          %s182 = smul.addr %s181, 8
          %s183 = scalar_lea.vmem %s0, %s182
        $region28: #{cross_attention_forward.5} parent=23 // pred_fallthru
          _
        // Predicated region
        $region29: #{cross_attention_forward.5} parent=23 // pred_check
          %p184 = pneg %p73
        $region30: #{cross_attention_forward.5} parent=23 // pred_check_branch
          %186 = sbr.rel (%p184) target = $region32
        $region31: #{cross_attention_forward.5} parent=23 // pred_region
          %p187 = scmp.lt.s32.totalorder %s20, 1
          %s188 = scalar_select %p187, %s20, 1
          %s189 = smul.addr %s188, 2
          %s190 = smul.addr %s189, 8
          %s191 = scalar_lea.vmem %s1, %s190
        $region32: #{cross_attention_forward.5} parent=23 // pred_fallthru
          _
      $region24: #{cross_attention_forward.5} parent=5 // pred_fallthru
        _
      %p192 = scmp.le.s32.totalorder 1, %s13
      %p193 = scmp.lt.s32.totalorder %s13, 3
      %p194 = pnand %p192, %p193
      %p195 = pneg %p194
      // Predicated region
      $region33: #{cross_attention_forward.5} parent=5 // pred_check
        _
      $region34: #{cross_attention_forward.5} parent=5 // pred_check_branch
        %197 = sbr.rel (%p194) target = $region36
      $region35: #{cross_attention_forward.5} parent=5 // pred_region
        %s198 = ssub.s32 %s13, 1
        %p199 = scmp.lt.s32.totalorder %s22, 1
        %s200 = scalar_select %p199, %s22, 1
        %p201 = scmp.lt.s32.totalorder %s23, 0
        %s202 = scalar_select %p201, %s23, 0
        %s203 = sadd.s32 %s202, %s200
        %s204 = smul.addr %s203, 8
        %s205 = scalar_lea.vmem %s0, %s204
        %p206 = pneg %p53
        %p207 = pneg %p50
        %p208 = scmp.lt.s32.totalorder %s22, 1
        %s209 = scalar_select %p208, %s22, 1
        %s210 = smul.addr %s209, 2
        %s211 = smul.addr %s210, 8
        %s212 = scalar_lea.vmem %s1, %s211
        %p213 = pneg %p79
        %p214 = pneg %p76
        %p215 = pneg %p100
        %p216 = pneg %p97
        %p217 = pneg %p121
        %p218 = pneg %p118
        %p219 = pneg %p149
        %p220 = pneg %p146
        %s221 = sand.u32 %s136, 1
        %s222 = scalar_lea.sflag [#allocation3], %s221
        %s223 = sand.u32 %s136, 1
        %s224 = smul.addr %s223, 8
        %s225 = scalar_lea.vmem [#allocation2], %s224
        %p226 = scmp.lt.s32.totalorder %s22, 1
        %s227 = scalar_select %p226, %s22, 1
        %p228 = scmp.lt.s32.totalorder %s23, 0
        %s229 = scalar_select %p228, %s23, 0
        %s230 = sadd.s32 %s229, %s227
        %s231 = smul.addr %s230, 8
        %s232 = scalar_lea.vmem %s0, %s231
        %p233 = scmp.lt.s32.totalorder %s22, 1
        %s234 = scalar_select %p233, %s22, 1
        %s235 = smul.addr %s234, 2
        %s236 = smul.addr %s235, 8
        %s237 = scalar_lea.vmem %s1, %s236
        %v238 = vld [vmem:[%s232] sm:$0xff]
        %v239 = vld [vmem:[%s237] sm:$0xff]
        %v240 = vld [vmem:[%s237 + $0x8] sm:$0xff]
        %vm241 = vcmask 64512
        %v243 = vsel %vm241, %v238, 0
        %v246 = vsel %vm241, %v239, 0
        %v249 = vsel %vm241, %v240, 0
        %251 = vmatprep.subr.mxu0 0.0
        %252 = vmatpush1.xpose.msra.mxu0 %v246
        %253 = vmatprep.subr.mxu0 0.0
        %254 = vmatpush1.xpose.msra.mxu0 %v249
        %255 = vmatprep.subr.mxu0 0.0
        %256 = vmatpush1.xpose.msra.mxu0 0.0
        %257 = vmatprep.subr.mxu0 0.0
        %258 = vmatpush1.xpose.msra.mxu0 0.0
        %259 = vmatprep.subr.mxu0 0.0
        %260 = vmatpush1.xpose.msra.mxu0 0.0
        %261 = vmatprep.subr.mxu0 0.0
        %262 = vmatpush1.xpose.msra.mxu0 0.0
        %263 = vmatprep.subr.mxu0 0.0
        %264 = vmatpush1.xpose.msra.mxu0 0.0
        %265 = vmatprep.subr.mxu0 0.0
        %266 = vmatpush1.xpose.msra.mxu0 0.0
        %267 = vmatprep.subr.mxu0 0.0
        %268 = vmatpush1.xpose.msra.mxu0 0.0
        %269 = vmatprep.subr.mxu0 0.0
        %270 = vmatpush1.xpose.msra.mxu0 0.0
        %271 = vmatprep.subr.mxu0 0.0
        %272 = vmatpush1.xpose.msra.mxu0 0.0
        %273 = vmatprep.subr.mxu0 0.0
        %274 = vmatpush1.xpose.msra.mxu0 0.0
        %275 = vmatprep.subr.mxu0 0.0
        %276 = vmatpush1.xpose.msra.mxu0 0.0
        %277 = vmatprep.subr.mxu0 0.0
        %278 = vmatpush1.xpose.msra.mxu0 0.0
        %279 = vmatprep.subr.mxu0 0.0
        %280 = vmatpush1.xpose.msra.mxu0 0.0
        %281 = vmatprep.subr.mxu0 0.0
        %282 = vmatpush1.xpose.msra.mxu0 0.0
        %283 = vmatprep.subr.mxu0 0.0
        %284 = vmatpush1.xpose.msra.mxu0 0.0
        %285 = vmatprep.subr.mxu0 0.0
        %286 = vmatpush1.xpose.msra.mxu0 0.0
        %287 = vmatprep.subr.mxu0 0.0
        %288 = vmatpush1.xpose.msra.mxu0 0.0
        %289 = vmatprep.subr.mxu0 0.0
        %290 = vmatpush1.xpose.msra.mxu0 0.0
        %291 = vmatprep.subr.mxu0 0.0
        %292 = vmatpush1.xpose.msra.mxu0 0.0
        %293 = vmatprep.subr.mxu0 0.0
        %294 = vmatpush1.xpose.msra.mxu0 0.0
        %295 = vmatprep.subr.mxu0 0.0
        %296 = vmatpush1.xpose.msra.mxu0 0.0
        %297 = vmatprep.subr.mxu0 0.0
        %298 = vmatpush1.xpose.msra.mxu0 0.0
        %299 = vmatprep.subr.mxu0 0.0
        %300 = vmatpush1.xpose.msra.mxu0 0.0
        %301 = vmatprep.subr.mxu0 0.0
        %302 = vmatpush1.xpose.msra.mxu0 0.0
        %303 = vmatprep.subr.mxu0 0.0
        %304 = vmatpush1.xpose.msra.mxu0 0.0
        %305 = vmatprep.subr.mxu0 0.0
        %306 = vmatpush1.xpose.msra.mxu0 0.0
        %307 = vmatprep.subr.mxu0 0.0
        %308 = vmatpush1.xpose.msra.mxu0 0.0
        %309 = vmatprep.subr.mxu0 0.0
        %310 = vmatpush1.xpose.msra.mxu0 0.0
        %311 = vmatprep.subr.mxu0 0.0
        %312 = vmatpush1.xpose.msra.mxu0 0.0
        %313 = vmatprep.subr.mxu0 0.0
        %314 = vmatpush1.xpose.msra.mxu0 0.0
        %315 = vmatprep.mubr.f32.mxu0 0.0
        %316 = vmatmul.mubr.f32.gmra.mrb[0].mxu0 %v243
        %v317 = vpop.f32.mrb[0].mxu0
        %v318 = vadd.f32 0.0, %v317
        %v319 = vpop.f32.mrb[0].mxu0
        %320 = vdwg.mxu0
        %vm321 = vcmask 130048
        %v322 = vsel %vm321, %v318, -inf
        %323 = vmax.xlane.f32.xlu0 %v322
        %v324 = vpop.xlane.xlu0 %323
        %v325 = vsub.f32 %v318, %v324
        %v326 = vmul.f32 %v325, 1.442695
        %v327 = vpow.pop %v326
        %v328 = vsel %vm321, %v327, 0.0
        %329 = vadd.xlane.f32.xlu0 %v328
        %v330 = vpop.xlane.xlu0 %329
        %v331 = vrcp.pop %v330
        %v332 = vmul.f32 %v330, %v331
        %v333 = vsub.f32 2.0, %v332
        %v334 = vmul.f32 %v331, %v333
        %v335 = vmul.f32 %v327, %v334
        %336 = vrot.lane.b32.xlu0 %v239, 96
        %v337 = vpop.permute.xlu0 %336
        %338 = vrot.lane.b32.xlu0 %v240, 96
        %v339 = vpop.permute.xlu0 %338
        %v343 = vsel %vm321, %v335, 0
        %345 = vmatprep.subr.mxu0 0.0
        %346 = vmatpush1.msra.mxu0 %v337
        %347 = vmatprep.subr.mxu0 0.0
        %348 = vmatpush1.msra.mxu0 %v339
        %349 = vmatprep.subr.mxu0 0.0
        %350 = vmatpush1.msra.mxu0 0.0
        %351 = vmatprep.subr.mxu0 0.0
        %352 = vmatpush1.msra.mxu0 0.0
        %353 = vmatprep.subr.mxu0 0.0
        %354 = vmatpush1.msra.mxu0 0.0
        %355 = vmatprep.subr.mxu0 0.0
        %356 = vmatpush1.msra.mxu0 0.0
        %357 = vmatprep.subr.mxu0 0.0
        %358 = vmatpush1.msra.mxu0 0.0
        %359 = vmatprep.subr.mxu0 0.0
        %360 = vmatpush1.msra.mxu0 0.0
        %361 = vmatprep.subr.mxu0 0.0
        %362 = vmatpush1.msra.mxu0 0.0
        %363 = vmatprep.subr.mxu0 0.0
        %364 = vmatpush1.msra.mxu0 0.0
        %365 = vmatprep.subr.mxu0 0.0
        %366 = vmatpush1.msra.mxu0 0.0
        %367 = vmatprep.subr.mxu0 0.0
        %368 = vmatpush1.msra.mxu0 0.0
        %369 = vmatprep.subr.mxu0 0.0
        %370 = vmatpush1.msra.mxu0 0.0
        %371 = vmatprep.subr.mxu0 0.0
        %372 = vmatpush1.msra.mxu0 0.0
        %373 = vmatprep.subr.mxu0 0.0
        %374 = vmatpush1.msra.mxu0 0.0
        %375 = vmatprep.subr.mxu0 0.0
        %376 = vmatpush1.msra.mxu0 0.0
        %377 = vmatprep.subr.mxu0 0.0
        %378 = vmatpush1.msra.mxu0 0.0
        %379 = vmatprep.subr.mxu0 0.0
        %380 = vmatpush1.msra.mxu0 0.0
        %381 = vmatprep.subr.mxu0 0.0
        %382 = vmatpush1.msra.mxu0 0.0
        %383 = vmatprep.subr.mxu0 0.0
        %384 = vmatpush1.msra.mxu0 0.0
        %385 = vmatprep.subr.mxu0 0.0
        %386 = vmatpush1.msra.mxu0 0.0
        %387 = vmatprep.subr.mxu0 0.0
        %388 = vmatpush1.msra.mxu0 0.0
        %389 = vmatprep.subr.mxu0 0.0
        %390 = vmatpush1.msra.mxu0 0.0
        %391 = vmatprep.subr.mxu0 0.0
        %392 = vmatpush1.msra.mxu0 0.0
        %393 = vmatprep.subr.mxu0 0.0
        %394 = vmatpush1.msra.mxu0 0.0
        %395 = vmatprep.subr.mxu0 0.0
        %396 = vmatpush1.msra.mxu0 0.0
        %397 = vmatprep.subr.mxu0 0.0
        %398 = vmatpush1.msra.mxu0 0.0
        %399 = vmatprep.subr.mxu0 0.0
        %400 = vmatpush1.msra.mxu0 0.0
        %401 = vmatprep.subr.mxu0 0.0
        %402 = vmatpush1.msra.mxu0 0.0
        %403 = vmatprep.subr.mxu0 0.0
        %404 = vmatpush1.msra.mxu0 0.0
        %405 = vmatprep.subr.mxu0 0.0
        %406 = vmatpush1.msra.mxu0 0.0
        %407 = vmatprep.subr.mxu0 0.0
        %408 = vmatpush1.msra.mxu0 0.0
        %409 = vmatprep.mubr.f32.mxu0 0.0
        %410 = vmatmul.mubr.f32.gmra.mrb[0].mxu0 %v343
        %v411 = vpop.f32.mrb[0].mxu0
        %v412 = vadd.f32 0.0, %v411
        %v413 = vpop.f32.mrb[0].mxu0
        %414 = vdwg.mxu0
        %415 = vrot.lane.b32.xlu0 %v238, 120
        %v416 = vpop.permute.xlu0 %415
        %417 = vrot.lane.b32.xlu0 %v239, 120
        %v418 = vpop.permute.xlu0 %417
        %419 = vrot.lane.b32.xlu0 %v240, 120
        %v420 = vpop.permute.xlu0 %419
        %v421 = vsel %vm241, %v416, 0
        %v423 = vsel %vm241, %v418, 0
        %v425 = vsel %vm241, %v420, 0
        %427 = vmatprep.subr.mxu0 0.0
        %428 = vmatpush1.xpose.msra.mxu0 %v423
        %429 = vmatprep.subr.mxu0 0.0
        %430 = vmatpush1.xpose.msra.mxu0 %v425
        %431 = vmatprep.subr.mxu0 0.0
        %432 = vmatpush1.xpose.msra.mxu0 0.0
        %433 = vmatprep.subr.mxu0 0.0
        %434 = vmatpush1.xpose.msra.mxu0 0.0
        %435 = vmatprep.subr.mxu0 0.0
        %436 = vmatpush1.xpose.msra.mxu0 0.0
        %437 = vmatprep.subr.mxu0 0.0
        %438 = vmatpush1.xpose.msra.mxu0 0.0
        %439 = vmatprep.subr.mxu0 0.0
        %440 = vmatpush1.xpose.msra.mxu0 0.0
        %441 = vmatprep.subr.mxu0 0.0
        %442 = vmatpush1.xpose.msra.mxu0 0.0
        %443 = vmatprep.subr.mxu0 0.0
        %444 = vmatpush1.xpose.msra.mxu0 0.0
        %445 = vmatprep.subr.mxu0 0.0
        %446 = vmatpush1.xpose.msra.mxu0 0.0
        %447 = vmatprep.subr.mxu0 0.0
        %448 = vmatpush1.xpose.msra.mxu0 0.0
        %449 = vmatprep.subr.mxu0 0.0
        %450 = vmatpush1.xpose.msra.mxu0 0.0
        %451 = vmatprep.subr.mxu0 0.0
        %452 = vmatpush1.xpose.msra.mxu0 0.0
        %453 = vmatprep.subr.mxu0 0.0
        %454 = vmatpush1.xpose.msra.mxu0 0.0
        %455 = vmatprep.subr.mxu0 0.0
        %456 = vmatpush1.xpose.msra.mxu0 0.0
        %457 = vmatprep.subr.mxu0 0.0
        %458 = vmatpush1.xpose.msra.mxu0 0.0
        %459 = vmatprep.subr.mxu0 0.0
        %460 = vmatpush1.xpose.msra.mxu0 0.0
        %461 = vmatprep.subr.mxu0 0.0
        %462 = vmatpush1.xpose.msra.mxu0 0.0
        %463 = vmatprep.subr.mxu0 0.0
        %464 = vmatpush1.xpose.msra.mxu0 0.0
        %465 = vmatprep.subr.mxu0 0.0
        %466 = vmatpush1.xpose.msra.mxu0 0.0
        %467 = vmatprep.subr.mxu0 0.0
        %468 = vmatpush1.xpose.msra.mxu0 0.0
        %469 = vmatprep.subr.mxu0 0.0
        %470 = vmatpush1.xpose.msra.mxu0 0.0
        %471 = vmatprep.subr.mxu0 0.0
        %472 = vmatpush1.xpose.msra.mxu0 0.0
        %473 = vmatprep.subr.mxu0 0.0
        %474 = vmatpush1.xpose.msra.mxu0 0.0
        %475 = vmatprep.subr.mxu0 0.0
        %476 = vmatpush1.xpose.msra.mxu0 0.0
        %477 = vmatprep.subr.mxu0 0.0
        %478 = vmatpush1.xpose.msra.mxu0 0.0
        %479 = vmatprep.subr.mxu0 0.0
        %480 = vmatpush1.xpose.msra.mxu0 0.0
        %481 = vmatprep.subr.mxu0 0.0
        %482 = vmatpush1.xpose.msra.mxu0 0.0
        %483 = vmatprep.subr.mxu0 0.0
        %484 = vmatpush1.xpose.msra.mxu0 0.0
        %485 = vmatprep.subr.mxu0 0.0
        %486 = vmatpush1.xpose.msra.mxu0 0.0
        %487 = vmatprep.subr.mxu0 0.0
        %488 = vmatpush1.xpose.msra.mxu0 0.0
        %489 = vmatprep.subr.mxu0 0.0
        %490 = vmatpush1.xpose.msra.mxu0 0.0
        %491 = vmatprep.mubr.f32.mxu0 0.0
        %492 = vmatmul.mubr.f32.gmra.mrb[0].mxu0 %v421
        %v493 = vpop.f32.mrb[0].mxu0
        %v494 = vadd.f32 0.0, %v493
        %v495 = vpop.f32.mrb[0].mxu0
        %496 = vdwg.mxu0
        %v497 = vsel %vm321, %v494, -inf
        %498 = vmax.xlane.f32.xlu0 %v497
        %v499 = vpop.xlane.xlu0 %498
        %v500 = vsub.f32 %v494, %v499
        %v501 = vmul.f32 %v500, 1.442695
        %v502 = vpow.pop %v501
        %v503 = vsel %vm321, %v502, 0.0
        %504 = vadd.xlane.f32.xlu0 %v503
        %v505 = vpop.xlane.xlu0 %504
        %v506 = vrcp.pop %v505
        %v507 = vmul.f32 %v505, %v506
        %v508 = vsub.f32 2.0, %v507
        %v509 = vmul.f32 %v506, %v508
        %v510 = vmul.f32 %v502, %v509
        %511 = vrot.lane.b32.xlu0 %v239, 88
        %v512 = vpop.permute.xlu0 %511
        %513 = vrot.lane.b32.xlu0 %v240, 88
        %v514 = vpop.permute.xlu0 %513
        %v518 = vsel %vm321, %v510, 0
        %520 = vmatprep.subr.mxu0 0.0
        %521 = vmatpush1.msra.mxu0 %v512
        %522 = vmatprep.subr.mxu0 0.0
        %523 = vmatpush1.msra.mxu0 %v514
        %524 = vmatprep.subr.mxu0 0.0
        %525 = vmatpush1.msra.mxu0 0.0
        %526 = vmatprep.subr.mxu0 0.0
        %527 = vmatpush1.msra.mxu0 0.0
        %528 = vmatprep.subr.mxu0 0.0
        %529 = vmatpush1.msra.mxu0 0.0
        %530 = vmatprep.subr.mxu0 0.0
        %531 = vmatpush1.msra.mxu0 0.0
        %532 = vmatprep.subr.mxu0 0.0
        %533 = vmatpush1.msra.mxu0 0.0
        %534 = vmatprep.subr.mxu0 0.0
        %535 = vmatpush1.msra.mxu0 0.0
        %536 = vmatprep.subr.mxu0 0.0
        %537 = vmatpush1.msra.mxu0 0.0
        %538 = vmatprep.subr.mxu0 0.0
        %539 = vmatpush1.msra.mxu0 0.0
        %540 = vmatprep.subr.mxu0 0.0
        %541 = vmatpush1.msra.mxu0 0.0
        %542 = vmatprep.subr.mxu0 0.0
        %543 = vmatpush1.msra.mxu0 0.0
        %544 = vmatprep.subr.mxu0 0.0
        %545 = vmatpush1.msra.mxu0 0.0
        %546 = vmatprep.subr.mxu0 0.0
        %547 = vmatpush1.msra.mxu0 0.0
        %548 = vmatprep.subr.mxu0 0.0
        %549 = vmatpush1.msra.mxu0 0.0
        %550 = vmatprep.subr.mxu0 0.0
        %551 = vmatpush1.msra.mxu0 0.0
        %552 = vmatprep.subr.mxu0 0.0
        %553 = vmatpush1.msra.mxu0 0.0
        %554 = vmatprep.subr.mxu0 0.0
        %555 = vmatpush1.msra.mxu0 0.0
        %556 = vmatprep.subr.mxu0 0.0
        %557 = vmatpush1.msra.mxu0 0.0
        %558 = vmatprep.subr.mxu0 0.0
        %559 = vmatpush1.msra.mxu0 0.0
        %560 = vmatprep.subr.mxu0 0.0
        %561 = vmatpush1.msra.mxu0 0.0
        %562 = vmatprep.subr.mxu0 0.0
        %563 = vmatpush1.msra.mxu0 0.0
        %564 = vmatprep.subr.mxu0 0.0
        %565 = vmatpush1.msra.mxu0 0.0
        %566 = vmatprep.subr.mxu0 0.0
        %567 = vmatpush1.msra.mxu0 0.0
        %568 = vmatprep.subr.mxu0 0.0
        %569 = vmatpush1.msra.mxu0 0.0
        %570 = vmatprep.subr.mxu0 0.0
        %571 = vmatpush1.msra.mxu0 0.0
        %572 = vmatprep.subr.mxu0 0.0
        %573 = vmatpush1.msra.mxu0 0.0
        %574 = vmatprep.subr.mxu0 0.0
        %575 = vmatpush1.msra.mxu0 0.0
        %576 = vmatprep.subr.mxu0 0.0
        %577 = vmatpush1.msra.mxu0 0.0
        %578 = vmatprep.subr.mxu0 0.0
        %579 = vmatpush1.msra.mxu0 0.0
        %580 = vmatprep.subr.mxu0 0.0
        %581 = vmatpush1.msra.mxu0 0.0
        %582 = vmatprep.subr.mxu0 0.0
        %583 = vmatpush1.msra.mxu0 0.0
        %584 = vmatprep.mubr.f32.mxu0 0.0
        %585 = vmatmul.mubr.f32.gmra.mrb[0].mxu0 %v518
        %v586 = vpop.f32.mrb[0].mxu0
        %v587 = vadd.f32 0.0, %v586
        %v588 = vpop.f32.mrb[0].mxu0
        %589 = vdwg.mxu0
        %590 = vrot.lane.b32.xlu0 %v238, 112
        %v591 = vpop.permute.xlu0 %590
        %592 = vrot.lane.b32.xlu0 %v239, 112
        %v593 = vpop.permute.xlu0 %592
        %594 = vrot.lane.b32.xlu0 %v240, 112
        %v595 = vpop.permute.xlu0 %594
        %v596 = vsel %vm241, %v591, 0
        %v598 = vsel %vm241, %v593, 0
        %v600 = vsel %vm241, %v595, 0
        %602 = vmatprep.subr.mxu0 0.0
        %603 = vmatpush1.xpose.msra.mxu0 %v598
        %604 = vmatprep.subr.mxu0 0.0
        %605 = vmatpush1.xpose.msra.mxu0 %v600
        %606 = vmatprep.subr.mxu0 0.0
        %607 = vmatpush1.xpose.msra.mxu0 0.0
        %608 = vmatprep.subr.mxu0 0.0
        %609 = vmatpush1.xpose.msra.mxu0 0.0
        %610 = vmatprep.subr.mxu0 0.0
        %611 = vmatpush1.xpose.msra.mxu0 0.0
        %612 = vmatprep.subr.mxu0 0.0
        %613 = vmatpush1.xpose.msra.mxu0 0.0
        %614 = vmatprep.subr.mxu0 0.0
        %615 = vmatpush1.xpose.msra.mxu0 0.0
        %616 = vmatprep.subr.mxu0 0.0
        %617 = vmatpush1.xpose.msra.mxu0 0.0
        %618 = vmatprep.subr.mxu0 0.0
        %619 = vmatpush1.xpose.msra.mxu0 0.0
        %620 = vmatprep.subr.mxu0 0.0
        %621 = vmatpush1.xpose.msra.mxu0 0.0
        %622 = vmatprep.subr.mxu0 0.0
        %623 = vmatpush1.xpose.msra.mxu0 0.0
        %624 = vmatprep.subr.mxu0 0.0
        %625 = vmatpush1.xpose.msra.mxu0 0.0
        %626 = vmatprep.subr.mxu0 0.0
        %627 = vmatpush1.xpose.msra.mxu0 0.0
        %628 = vmatprep.subr.mxu0 0.0
        %629 = vmatpush1.xpose.msra.mxu0 0.0
        %630 = vmatprep.subr.mxu0 0.0
        %631 = vmatpush1.xpose.msra.mxu0 0.0
        %632 = vmatprep.subr.mxu0 0.0
        %633 = vmatpush1.xpose.msra.mxu0 0.0
        %634 = vmatprep.subr.mxu0 0.0
        %635 = vmatpush1.xpose.msra.mxu0 0.0
        %636 = vmatprep.subr.mxu0 0.0
        %637 = vmatpush1.xpose.msra.mxu0 0.0
        %638 = vmatprep.subr.mxu0 0.0
        %639 = vmatpush1.xpose.msra.mxu0 0.0
        %640 = vmatprep.subr.mxu0 0.0
        %641 = vmatpush1.xpose.msra.mxu0 0.0
        %642 = vmatprep.subr.mxu0 0.0
        %643 = vmatpush1.xpose.msra.mxu0 0.0
        %644 = vmatprep.subr.mxu0 0.0
        %645 = vmatpush1.xpose.msra.mxu0 0.0
        %646 = vmatprep.subr.mxu0 0.0
        %647 = vmatpush1.xpose.msra.mxu0 0.0
        %648 = vmatprep.subr.mxu0 0.0
        %649 = vmatpush1.xpose.msra.mxu0 0.0
        %650 = vmatprep.subr.mxu0 0.0
        %651 = vmatpush1.xpose.msra.mxu0 0.0
        %652 = vmatprep.subr.mxu0 0.0
        %653 = vmatpush1.xpose.msra.mxu0 0.0
        %654 = vmatprep.subr.mxu0 0.0
        %655 = vmatpush1.xpose.msra.mxu0 0.0
        %656 = vmatprep.subr.mxu0 0.0
        %657 = vmatpush1.xpose.msra.mxu0 0.0
        %658 = vmatprep.subr.mxu0 0.0
        %659 = vmatpush1.xpose.msra.mxu0 0.0
        %660 = vmatprep.subr.mxu0 0.0
        %661 = vmatpush1.xpose.msra.mxu0 0.0
        %662 = vmatprep.subr.mxu0 0.0
        %663 = vmatpush1.xpose.msra.mxu0 0.0
        %664 = vmatprep.subr.mxu0 0.0
        %665 = vmatpush1.xpose.msra.mxu0 0.0
        %666 = vmatprep.mubr.f32.mxu0 0.0
        %667 = vmatmul.mubr.f32.gmra.mrb[0].mxu0 %v596
        %v668 = vpop.f32.mrb[0].mxu0
        %v669 = vadd.f32 0.0, %v668
        %v670 = vpop.f32.mrb[0].mxu0
        %671 = vdwg.mxu0
        %v672 = vsel %vm321, %v669, -inf
        %673 = vmax.xlane.f32.xlu0 %v672
        %v674 = vpop.xlane.xlu0 %673
        %v675 = vsub.f32 %v669, %v674
        %v676 = vmul.f32 %v675, 1.442695
        %v677 = vpow.pop %v676
        %v678 = vsel %vm321, %v677, 0.0
        %679 = vadd.xlane.f32.xlu0 %v678
        %v680 = vpop.xlane.xlu0 %679
        %v681 = vrcp.pop %v680
        %v682 = vmul.f32 %v680, %v681
        %v683 = vsub.f32 2.0, %v682
        %v684 = vmul.f32 %v681, %v683
        %v685 = vmul.f32 %v677, %v684
        %686 = vrot.lane.b32.xlu0 %v239, 80
        %v687 = vpop.permute.xlu0 %686
        %688 = vrot.lane.b32.xlu0 %v240, 80
        %v689 = vpop.permute.xlu0 %688
        %v693 = vsel %vm321, %v685, 0
        %695 = vmatprep.subr.mxu0 0.0
        %696 = vmatpush1.msra.mxu0 %v687
        %697 = vmatprep.subr.mxu0 0.0
        %698 = vmatpush1.msra.mxu0 %v689
        %699 = vmatprep.subr.mxu0 0.0
        %700 = vmatpush1.msra.mxu0 0.0
        %701 = vmatprep.subr.mxu0 0.0
        %702 = vmatpush1.msra.mxu0 0.0
        %703 = vmatprep.subr.mxu0 0.0
        %704 = vmatpush1.msra.mxu0 0.0
        %705 = vmatprep.subr.mxu0 0.0
        %706 = vmatpush1.msra.mxu0 0.0
        %707 = vmatprep.subr.mxu0 0.0
        %708 = vmatpush1.msra.mxu0 0.0
        %709 = vmatprep.subr.mxu0 0.0
        %710 = vmatpush1.msra.mxu0 0.0
        %711 = vmatprep.subr.mxu0 0.0
        %712 = vmatpush1.msra.mxu0 0.0
        %713 = vmatprep.subr.mxu0 0.0
        %714 = vmatpush1.msra.mxu0 0.0
        %715 = vmatprep.subr.mxu0 0.0
        %716 = vmatpush1.msra.mxu0 0.0
        %717 = vmatprep.subr.mxu0 0.0
        %718 = vmatpush1.msra.mxu0 0.0
        %719 = vmatprep.subr.mxu0 0.0
        %720 = vmatpush1.msra.mxu0 0.0
        %721 = vmatprep.subr.mxu0 0.0
        %722 = vmatpush1.msra.mxu0 0.0
        %723 = vmatprep.subr.mxu0 0.0
        %724 = vmatpush1.msra.mxu0 0.0
        %725 = vmatprep.subr.mxu0 0.0
        %726 = vmatpush1.msra.mxu0 0.0
        %727 = vmatprep.subr.mxu0 0.0
        %728 = vmatpush1.msra.mxu0 0.0
        %729 = vmatprep.subr.mxu0 0.0
        %730 = vmatpush1.msra.mxu0 0.0
        %731 = vmatprep.subr.mxu0 0.0
        %732 = vmatpush1.msra.mxu0 0.0
        %733 = vmatprep.subr.mxu0 0.0
        %734 = vmatpush1.msra.mxu0 0.0
        %735 = vmatprep.subr.mxu0 0.0
        %736 = vmatpush1.msra.mxu0 0.0
        %737 = vmatprep.subr.mxu0 0.0
        %738 = vmatpush1.msra.mxu0 0.0
        %739 = vmatprep.subr.mxu0 0.0
        %740 = vmatpush1.msra.mxu0 0.0
        %741 = vmatprep.subr.mxu0 0.0
        %742 = vmatpush1.msra.mxu0 0.0
        %743 = vmatprep.subr.mxu0 0.0
        %744 = vmatpush1.msra.mxu0 0.0
        %745 = vmatprep.subr.mxu0 0.0
        %746 = vmatpush1.msra.mxu0 0.0
        %747 = vmatprep.subr.mxu0 0.0
        %748 = vmatpush1.msra.mxu0 0.0
        %749 = vmatprep.subr.mxu0 0.0
        %750 = vmatpush1.msra.mxu0 0.0
        %751 = vmatprep.subr.mxu0 0.0
        %752 = vmatpush1.msra.mxu0 0.0
        %753 = vmatprep.subr.mxu0 0.0
        %754 = vmatpush1.msra.mxu0 0.0
        %755 = vmatprep.subr.mxu0 0.0
        %756 = vmatpush1.msra.mxu0 0.0
        %757 = vmatprep.subr.mxu0 0.0
        %758 = vmatpush1.msra.mxu0 0.0
        %759 = vmatprep.mubr.f32.mxu0 0.0
        %760 = vmatmul.mubr.f32.gmra.mrb[0].mxu0 %v693
        %v761 = vpop.f32.mrb[0].mxu0
        %v762 = vadd.f32 0.0, %v761
        %v763 = vpop.f32.mrb[0].mxu0
        %764 = vdwg.mxu0
        %765 = vrot.lane.b32.xlu0 %v238, 104
        %v766 = vpop.permute.xlu0 %765
        %767 = vrot.lane.b32.xlu0 %v239, 104
        %v768 = vpop.permute.xlu0 %767
        %769 = vrot.lane.b32.xlu0 %v240, 104
        %v770 = vpop.permute.xlu0 %769
        %v771 = vsel %vm241, %v766, 0
        %v773 = vsel %vm241, %v768, 0
        %v775 = vsel %vm241, %v770, 0
        %777 = vmatprep.subr.mxu0 0.0
        %778 = vmatpush1.xpose.msra.mxu0 %v773
        %779 = vmatprep.subr.mxu0 0.0
        %780 = vmatpush1.xpose.msra.mxu0 %v775
        %781 = vmatprep.subr.mxu0 0.0
        %782 = vmatpush1.xpose.msra.mxu0 0.0
        %783 = vmatprep.subr.mxu0 0.0
        %784 = vmatpush1.xpose.msra.mxu0 0.0
        %785 = vmatprep.subr.mxu0 0.0
        %786 = vmatpush1.xpose.msra.mxu0 0.0
        %787 = vmatprep.subr.mxu0 0.0
        %788 = vmatpush1.xpose.msra.mxu0 0.0
        %789 = vmatprep.subr.mxu0 0.0
        %790 = vmatpush1.xpose.msra.mxu0 0.0
        %791 = vmatprep.subr.mxu0 0.0
        %792 = vmatpush1.xpose.msra.mxu0 0.0
        %793 = vmatprep.subr.mxu0 0.0
        %794 = vmatpush1.xpose.msra.mxu0 0.0
        %795 = vmatprep.subr.mxu0 0.0
        %796 = vmatpush1.xpose.msra.mxu0 0.0
        %797 = vmatprep.subr.mxu0 0.0
        %798 = vmatpush1.xpose.msra.mxu0 0.0
        %799 = vmatprep.subr.mxu0 0.0
        %800 = vmatpush1.xpose.msra.mxu0 0.0
        %801 = vmatprep.subr.mxu0 0.0
        %802 = vmatpush1.xpose.msra.mxu0 0.0
        %803 = vmatprep.subr.mxu0 0.0
        %804 = vmatpush1.xpose.msra.mxu0 0.0
        %805 = vmatprep.subr.mxu0 0.0
        %806 = vmatpush1.xpose.msra.mxu0 0.0
        %807 = vmatprep.subr.mxu0 0.0
        %808 = vmatpush1.xpose.msra.mxu0 0.0
        %809 = vmatprep.subr.mxu0 0.0
        %810 = vmatpush1.xpose.msra.mxu0 0.0
        %811 = vmatprep.subr.mxu0 0.0
        %812 = vmatpush1.xpose.msra.mxu0 0.0
        %813 = vmatprep.subr.mxu0 0.0
        %814 = vmatpush1.xpose.msra.mxu0 0.0
        %815 = vmatprep.subr.mxu0 0.0
        %816 = vmatpush1.xpose.msra.mxu0 0.0
        %817 = vmatprep.subr.mxu0 0.0
        %818 = vmatpush1.xpose.msra.mxu0 0.0
        %819 = vmatprep.subr.mxu0 0.0
        %820 = vmatpush1.xpose.msra.mxu0 0.0
        %821 = vmatprep.subr.mxu0 0.0
        %822 = vmatpush1.xpose.msra.mxu0 0.0
        %823 = vmatprep.subr.mxu0 0.0
        %824 = vmatpush1.xpose.msra.mxu0 0.0
        %825 = vmatprep.subr.mxu0 0.0
        %826 = vmatpush1.xpose.msra.mxu0 0.0
        %827 = vmatprep.subr.mxu0 0.0
        %828 = vmatpush1.xpose.msra.mxu0 0.0
        %829 = vmatprep.subr.mxu0 0.0
        %830 = vmatpush1.xpose.msra.mxu0 0.0
        %831 = vmatprep.subr.mxu0 0.0
        %832 = vmatpush1.xpose.msra.mxu0 0.0
        %833 = vmatprep.subr.mxu0 0.0
        %834 = vmatpush1.xpose.msra.mxu0 0.0
        %835 = vmatprep.subr.mxu0 0.0
        %836 = vmatpush1.xpose.msra.mxu0 0.0
        %837 = vmatprep.subr.mxu0 0.0
        %838 = vmatpush1.xpose.msra.mxu0 0.0
        %839 = vmatprep.subr.mxu0 0.0
        %840 = vmatpush1.xpose.msra.mxu0 0.0
        %841 = vmatprep.mubr.f32.mxu0 0.0
        %842 = vmatmul.mubr.f32.gmra.mrb[0].mxu0 %v771
        %v843 = vpop.f32.mrb[0].mxu0
        %v844 = vadd.f32 0.0, %v843
        %v845 = vpop.f32.mrb[0].mxu0
        %846 = vdwg.mxu0
        %v847 = vsel %vm321, %v844, -inf
        %848 = vmax.xlane.f32.xlu0 %v847
        %v849 = vpop.xlane.xlu0 %848
        %v850 = vsub.f32 %v844, %v849
        %v851 = vmul.f32 %v850, 1.442695
        %v852 = vpow.pop %v851
        %v853 = vsel %vm321, %v852, 0.0
        %854 = vadd.xlane.f32.xlu0 %v853
        %v855 = vpop.xlane.xlu0 %854
        %v856 = vrcp.pop %v855
        %v857 = vmul.f32 %v855, %v856
        %v858 = vsub.f32 2.0, %v857
        %v859 = vmul.f32 %v856, %v858
        %v860 = vmul.f32 %v852, %v859
        %861 = vrot.lane.b32.xlu0 %v239, 72
        %v862 = vpop.permute.xlu0 %861
        %863 = vrot.lane.b32.xlu0 %v240, 72
        %v864 = vpop.permute.xlu0 %863
        %v868 = vsel %vm321, %v860, 0
        %870 = vmatprep.subr.mxu0 0.0
        %871 = vmatpush1.msra.mxu0 %v862
        %872 = vmatprep.subr.mxu0 0.0
        %873 = vmatpush1.msra.mxu0 %v864
        %874 = vmatprep.subr.mxu0 0.0
        %875 = vmatpush1.msra.mxu0 0.0
        %876 = vmatprep.subr.mxu0 0.0
        %877 = vmatpush1.msra.mxu0 0.0
        %878 = vmatprep.subr.mxu0 0.0
        %879 = vmatpush1.msra.mxu0 0.0
        %880 = vmatprep.subr.mxu0 0.0
        %881 = vmatpush1.msra.mxu0 0.0
        %882 = vmatprep.subr.mxu0 0.0
        %883 = vmatpush1.msra.mxu0 0.0
        %884 = vmatprep.subr.mxu0 0.0
        %885 = vmatpush1.msra.mxu0 0.0
        %886 = vmatprep.subr.mxu0 0.0
        %887 = vmatpush1.msra.mxu0 0.0
        %888 = vmatprep.subr.mxu0 0.0
        %889 = vmatpush1.msra.mxu0 0.0
        %890 = vmatprep.subr.mxu0 0.0
        %891 = vmatpush1.msra.mxu0 0.0
        %892 = vmatprep.subr.mxu0 0.0
        %893 = vmatpush1.msra.mxu0 0.0
        %894 = vmatprep.subr.mxu0 0.0
        %895 = vmatpush1.msra.mxu0 0.0
        %896 = vmatprep.subr.mxu0 0.0
        %897 = vmatpush1.msra.mxu0 0.0
        %898 = vmatprep.subr.mxu0 0.0
        %899 = vmatpush1.msra.mxu0 0.0
        %900 = vmatprep.subr.mxu0 0.0
        %901 = vmatpush1.msra.mxu0 0.0
        %902 = vmatprep.subr.mxu0 0.0
        %903 = vmatpush1.msra.mxu0 0.0
        %904 = vmatprep.subr.mxu0 0.0
        %905 = vmatpush1.msra.mxu0 0.0
        %906 = vmatprep.subr.mxu0 0.0
        %907 = vmatpush1.msra.mxu0 0.0
        %908 = vmatprep.subr.mxu0 0.0
        %909 = vmatpush1.msra.mxu0 0.0
        %910 = vmatprep.subr.mxu0 0.0
        %911 = vmatpush1.msra.mxu0 0.0
        %912 = vmatprep.subr.mxu0 0.0
        %913 = vmatpush1.msra.mxu0 0.0
        %914 = vmatprep.subr.mxu0 0.0
        %915 = vmatpush1.msra.mxu0 0.0
        %916 = vmatprep.subr.mxu0 0.0
        %917 = vmatpush1.msra.mxu0 0.0
        %918 = vmatprep.subr.mxu0 0.0
        %919 = vmatpush1.msra.mxu0 0.0
        %920 = vmatprep.subr.mxu0 0.0
        %921 = vmatpush1.msra.mxu0 0.0
        %922 = vmatprep.subr.mxu0 0.0
        %923 = vmatpush1.msra.mxu0 0.0
        %924 = vmatprep.subr.mxu0 0.0
        %925 = vmatpush1.msra.mxu0 0.0
        %926 = vmatprep.subr.mxu0 0.0
        %927 = vmatpush1.msra.mxu0 0.0
        %928 = vmatprep.subr.mxu0 0.0
        %929 = vmatpush1.msra.mxu0 0.0
        %930 = vmatprep.subr.mxu0 0.0
        %931 = vmatpush1.msra.mxu0 0.0
        %932 = vmatprep.subr.mxu0 0.0
        %933 = vmatpush1.msra.mxu0 0.0
        %934 = vmatprep.mubr.f32.mxu0 0.0
        %935 = vmatmul.mubr.f32.gmra.mrb[0].mxu0 %v868
        %v936 = vpop.f32.mrb[0].mxu0
        %v937 = vadd.f32 0.0, %v936
        %v938 = vpop.f32.mrb[0].mxu0
        %939 = vdwg.mxu0
        %941 = vrot.lane.b32.xlu0 %v587, 8
        %v942 = vpop.permute.xlu0 %941
        %945 = vrot.lane.b32.xlu0 %v762, 16
        %v946 = vpop.permute.xlu0 %945
        %949 = vrot.lane.b32.xlu0 %v937, 24
        %v950 = vpop.permute.xlu0 %949
        %v952 = vsel %vm241, %v412, %v942
        %v953 = vsel %vm321, %v952, %v946
        %vm954 = vcmask 195584
        %v955 = vsel %vm954, %v953, %v950
        %v956 = vld [vmem:[%s2] sm:$0xff]
        %v957 = vld [vmem:[%s2 + $0x8] sm:$0xff]
        %v958 = vld [vmem:[%s2 + $0x10] sm:$0xff]
        %v959 = vld [vmem:[%s2 + $0x18] sm:$0xff]
        %v960 = vld [vmem:[%s3] sm:$0x1]
        %v962 = vlaneseq
        %v963 = vshrl.u32 %v962, 7
        %v964 = vsub.s32 0, %v963
        %v965 = vrot.slane %v960, %v964
        %vm967 = vcmask 261120
        %v969 = vsel %vm967, %v955, 0
        %971 = vmatprep.subr.mxu0 0.0
        %972 = vmatpush1.msra.mxu0 %v956
        %973 = vmatprep.subr.mxu0 0.0
        %974 = vmatpush1.msra.mxu0 %v957
        %975 = vmatprep.subr.mxu0 0.0
        %976 = vmatpush1.msra.mxu0 %v958
        %977 = vmatprep.subr.mxu0 0.0
        %978 = vmatpush1.msra.mxu0 %v959
        %979 = vmatprep.subr.mxu0 0.0
        %980 = vmatpush1.msra.mxu0 0.0
        %981 = vmatprep.subr.mxu0 0.0
        %982 = vmatpush1.msra.mxu0 0.0
        %983 = vmatprep.subr.mxu0 0.0
        %984 = vmatpush1.msra.mxu0 0.0
        %985 = vmatprep.subr.mxu0 0.0
        %986 = vmatpush1.msra.mxu0 0.0
        %987 = vmatprep.subr.mxu0 0.0
        %988 = vmatpush1.msra.mxu0 0.0
        %989 = vmatprep.subr.mxu0 0.0
        %990 = vmatpush1.msra.mxu0 0.0
        %991 = vmatprep.subr.mxu0 0.0
        %992 = vmatpush1.msra.mxu0 0.0
        %993 = vmatprep.subr.mxu0 0.0
        %994 = vmatpush1.msra.mxu0 0.0
        %995 = vmatprep.subr.mxu0 0.0
        %996 = vmatpush1.msra.mxu0 0.0
        %997 = vmatprep.subr.mxu0 0.0
        %998 = vmatpush1.msra.mxu0 0.0
        %999 = vmatprep.subr.mxu0 0.0
        %1000 = vmatpush1.msra.mxu0 0.0
        %1001 = vmatprep.subr.mxu0 0.0
        %1002 = vmatpush1.msra.mxu0 0.0
        %1003 = vmatprep.subr.mxu0 0.0
        %1004 = vmatpush1.msra.mxu0 0.0
        %1005 = vmatprep.subr.mxu0 0.0
        %1006 = vmatpush1.msra.mxu0 0.0
        %1007 = vmatprep.subr.mxu0 0.0
        %1008 = vmatpush1.msra.mxu0 0.0
        %1009 = vmatprep.subr.mxu0 0.0
        %1010 = vmatpush1.msra.mxu0 0.0
        %1011 = vmatprep.subr.mxu0 0.0
        %1012 = vmatpush1.msra.mxu0 0.0
        %1013 = vmatprep.subr.mxu0 0.0
        %1014 = vmatpush1.msra.mxu0 0.0
        %1015 = vmatprep.subr.mxu0 0.0
        %1016 = vmatpush1.msra.mxu0 0.0
        %1017 = vmatprep.subr.mxu0 0.0
        %1018 = vmatpush1.msra.mxu0 0.0
        %1019 = vmatprep.subr.mxu0 0.0
        %1020 = vmatpush1.msra.mxu0 0.0
        %1021 = vmatprep.subr.mxu0 0.0
        %1022 = vmatpush1.msra.mxu0 0.0
        %1023 = vmatprep.subr.mxu0 0.0
        %1024 = vmatpush1.msra.mxu0 0.0
        %1025 = vmatprep.subr.mxu0 0.0
        %1026 = vmatpush1.msra.mxu0 0.0
        %1027 = vmatprep.subr.mxu0 0.0
        %1028 = vmatpush1.msra.mxu0 0.0
        %1029 = vmatprep.subr.mxu0 0.0
        %1030 = vmatpush1.msra.mxu0 0.0
        %1031 = vmatprep.subr.mxu0 0.0
        %1032 = vmatpush1.msra.mxu0 0.0
        %1033 = vmatprep.subr.mxu0 0.0
        %1034 = vmatpush1.msra.mxu0 0.0
        %1035 = vmatprep.mubr.f32.mxu0 0.0
        %1036 = vmatmul.mubr.f32.gmra.mrb[0].mxu0 %v969
        %v1037 = vpop.f32.mrb[0].mxu0
        %v1038 = vadd.f32 %v965, %v1037
        %v1039 = vpop.f32.mrb[0].mxu0
        %1040 = vdwg.mxu0
        %1041 = vst.msk [vmem:[%s225] sm:$0xff] %vm967, %v1038
        %s1042 = sand.u32 %s136, 1
        %s1043 = scalar_lea.sflag [#allocation3], %s1042
        %s1044 = sand.u32 %s136, 1
        %s1045 = smul.addr %s1044, 8
        %s1046 = scalar_lea.vmem [#allocation2], %s1045
        // Predicated region
        $region37: #{cross_attention_forward.5} parent=35 // pred_check
          %p1047 = pneg %p146
        $region38: #{cross_attention_forward.5} parent=35 // pred_check_branch
          %1049 = sbr.rel (%p1047) target = $region40
        $region39: #{cross_attention_forward.5} parent=35 // pred_region
          %s1051 = ssub.s32 128, 128
          %1052 = vsyncadd %s1043, %s1051
          %s1053 = sadd.s32 %s23, %s22
          %s1054 = smul.addr %s1053, 128
          %s1055 = scalar_lea.hbm %s4, %s1054
          %s1057 = sshll.u32 %s1046, 4
          %s1058 = int_to_ptr.vmem [resolvable:$true] %s1057
          %1060 = dma.vmem_to_hbm [thread:$0]  %s1058, 128, %s1055, %s1043
        $region40: #{cross_attention_forward.5} parent=35 // pred_fallthru
          _
      $region36: #{cross_attention_forward.5} parent=5 // pred_fallthru
        _
      %p1061 = scmp.le.s32.totalorder 2, %s13
      // Predicated region
      $region41: #{cross_attention_forward.5} parent=5 // pred_check
        %p1062 = pneg %p1061
      $region42: #{cross_attention_forward.5} parent=5 // pred_check_branch
        %1064 = sbr.rel (%p1062) target = $region44
      $region43: #{cross_attention_forward.5} parent=5 // pred_region
        %s1065 = ssub.s32 %s13, 2
        // Predicated region
        $region45: #{cross_attention_forward.5} parent=43 // pred_check
          %p1066 = pneg %p152
        $region46: #{cross_attention_forward.5} parent=43 // pred_check_branch
          %1068 = sbr.rel (%p1066) target = $region48
        $region47: #{cross_attention_forward.5} parent=43 // pred_region
          %s1069 = sand.u32 %s137, 1
          %s1070 = scalar_lea.sflag [#allocation3], %s1069
          %s1071 = sand.u32 %s137, 1
          %s1072 = smul.addr %s1071, 8
          %s1073 = scalar_lea.vmem [#allocation2], %s1072
          %1074 = dma.done %s1070, 128
        $region48: #{cross_attention_forward.5} parent=43 // pred_fallthru
          _
      $region44: #{cross_attention_forward.5} parent=5 // pred_fallthru
        _
    $region6: #{cross_attention_forward.5} parent=1 // loop_footer
      %s17 = sadd.s32 1, %s13
    $region7: #{cross_attention_forward.5} parent=1 // loop_footer_branch
      %12 = sbr.rel target = $region3
    $region8: #{cross_attention_forward.5} parent=1 // loop_exit
      _
    %1075 = vsyncpa [#allocation3], 1
    %s1076 = scalar_lea.sflag [#allocation3], 1
    %1077 = vsyncpa %s1076, 1

</llo_original>
